<compile_context>
chip_gen: v5e
topology: v5e:2x2
jax: 0.10.0
libtpu: 0.0.40
codegen_flags: <defaults>
</compile_context>

<pallas_src>
import functools

import jax
import jax.numpy as jnp
from jax.experimental import pallas as pl
from jax.experimental.pallas import tpu as pltpu

LEAKY_SLOPE = 0.1                    # reference module uses nn.LeakyReLU(0.1)
_ROW_CAP = 4096                      # max patch rows (th * OW) per grid step
_VMEM_LIMIT = 48 * 1024 * 1024       # explicit scoped-VMEM limit (all chips)


def _round_up(x, m):
    return (x + m - 1) // m * m


def _apply_act(y, act):
    if act == "leaky":
        return jnp.where(y > 0, y, LEAKY_SLOPE * y)
    if act == "sigmoid":
        return jax.nn.sigmoid(y)
    return y


# ----------------------------------------------------------------------------
# Fused matmul + bias + activation Pallas kernels (encoder convs & linears)
# ----------------------------------------------------------------------------
def _mm_kernel_single(x_ref, w_ref, b_ref, o_ref, *, act):
    # Single K step: no accumulator scratch, no pl.when branches.
    y = jnp.dot(x_ref[...], w_ref[...], preferred_element_type=jnp.float32)
    y = _apply_act(y + b_ref[...], act)
    o_ref[...] = y.astype(o_ref.dtype)


def _mm_kernel_multi(x_ref, w_ref, b_ref, o_ref, acc_ref, *, act):
    k = pl.program_id(2)

    @pl.when(k == 0)
    def _():
        acc_ref[...] = jnp.zeros_like(acc_ref)

    acc_ref[...] += jnp.dot(x_ref[...], w_ref[...],
                            preferred_element_type=jnp.float32)

    @pl.when(k == pl.num_programs(2) - 1)
    def _():
        y = _apply_act(acc_ref[...] + b_ref[...], act)
        o_ref[...] = y.astype(o_ref.dtype)


def _pick_tm(m):
    if m <= 512 and m % 16 == 0:
        return m                       # single M block, no padding
    for t in (512, 256, 128):
        if m % t == 0:
            return t
    if m < 16:
        return 16                      # M=2 linears: pad 2 -> 16 only
    return 128


def _pick_tk(k):
    if k % 128 != 0:
        if k <= 2048:
            return k, k                # full-dim K block, no padding copy
        kp = _round_up(k, 128)
    else:
        kp = k
    if kp <= 2048:
        return kp, kp
    for t in (2048, 1792, 1536, 1280, 1024, 896, 768, 640, 512, 384, 256, 128):
        if kp % t == 0:
            return kp, t
    return kp, 128


def _pick_tn(n):
    if n % 256 == 0:
        return 256
    if n % 128 == 0:
        return 128
    return n                           # full-dim block, no padding copy


def matmul_bias_act(x, w, b, act=None, out_dtype=jnp.float32):
    """y = act(x @ w + b).  bf16 operands on the MXU, f32 accumulation."""
    M, K = x.shape
    K2, N = w.shape
    assert K == K2, (K, K2)

    x = x.astype(jnp.bfloat16)
    w = w.astype(jnp.bfloat16)
    b2 = b.astype(jnp.float32).reshape(1, N)

    tm = _pick_tm(M)
    M_pad = _round_up(M, tm)
    if M_pad != M:
        x = jnp.pad(x, ((0, M_pad - M), (0, 0)))

    K_pad, tk = _pick_tk(K)
    if K_pad != K:
        x = jnp.pad(x, ((0, 0), (0, K_pad - K)))
        w = jnp.pad(w, ((0, K_pad - K), (0, 0)))

    tn = _pick_tn(N)
    nk = K_pad // tk

    if nk == 1:
        out = pl.pallas_call(
            functools.partial(_mm_kernel_single, act=act),
            out_shape=jax.ShapeDtypeStruct((M_pad, N), out_dtype),
            grid_spec=pltpu.PrefetchScalarGridSpec(
                num_scalar_prefetch=0,
                grid=(M_pad // tm, N // tn),
                in_specs=[
                    pl.BlockSpec((tm, K_pad), lambda i, j: (i, 0)),
                    pl.BlockSpec((K_pad, tn), lambda i, j: (0, j)),
                    pl.BlockSpec((1, tn), lambda i, j: (0, j)),
                ],
                out_specs=pl.BlockSpec((tm, tn), lambda i, j: (i, j)),
            ),
            compiler_params=pltpu.CompilerParams(
                dimension_semantics=("parallel", "parallel"),
                vmem_limit_bytes=_VMEM_LIMIT),
        )(x, w, b2)
    else:
        out = pl.pallas_call(
            functools.partial(_mm_kernel_multi, act=act),
            out_shape=jax.ShapeDtypeStruct((M_pad, N), out_dtype),
            grid_spec=pltpu.PrefetchScalarGridSpec(
                num_scalar_prefetch=0,
                grid=(M_pad // tm, N // tn, nk),
                in_specs=[
                    pl.BlockSpec((tm, tk), lambda i, j, k: (i, k)),
                    pl.BlockSpec((tk, tn), lambda i, j, k: (k, j)),
                    pl.BlockSpec((1, tn), lambda i, j, k: (0, j)),
                ],
                out_specs=pl.BlockSpec((tm, tn), lambda i, j, k: (i, j)),
                scratch_shapes=[pltpu.VMEM((tm, tn), jnp.float32)],
            ),
            compiler_params=pltpu.CompilerParams(
                dimension_semantics=("parallel", "parallel", "arbitrary"),
                vmem_limit_bytes=_VMEM_LIMIT),
        )(x, w, b2)

    return out if M_pad == M else out[:M]


# ----------------------------------------------------------------------------
# im2col glue (plain-JAX slicing; used only for the small strided encoder convs)
# ----------------------------------------------------------------------------
def _im2col(xp, kh, kw, stride, OH, OW):
    patches = []
    for i in range(kh):
        for j in range(kw):
            patches.append(xp[:, i:i + stride * (OH - 1) + 1:stride,
                              j:j + stride * (OW - 1) + 1:stride, :])
    patches = jnp.stack(patches, axis=3)           # (N, OH, OW, kh*kw, Cin)
    N, Cin = xp.shape[0], xp.shape[3]
    return patches.reshape(N * OH * OW, kh * kw * Cin)


def _pick_th(oh, ow, cap=_ROW_CAP):
    best = 1
    for t in range(1, oh + 1):
        if oh % t == 0 and t * ow <= cap:
            best = t
    return best


# ----------------------------------------------------------------------------
# Fused (implicit-GEMM) 3x3 stride-1 conv kernel: im2col built in VMEM
# (used for the final 3-channel output conv)
# ----------------------------------------------------------------------------
def _conv3x3_kernel(x_ref, w_ref, b_ref, o_ref, *, th, ow, act):
    # x_ref: (1, OH+2, OW+2, Cin)  whole padded image (resident across rows)
    # w_ref: (9*Cin, Cout);  b_ref: (1, Cout);  o_ref: (1, th, OW, Cout)
    cin = x_ref.shape[3]
    cout = o_ref.shape[3]
    r0 = pl.multiple_of(pl.program_id(1) * th, th)
    wins = []
    for dh in range(3):
        for dw in range(3):
            wins.append(x_ref[0, pl.ds(r0 + dh, th), pl.ds(dw, ow), :])
    a = jnp.concatenate(wins, axis=2).reshape(th * ow, 9 * cin)
    y = jnp.dot(a, w_ref[...], preferred_element_type=jnp.float32)
    y = _apply_act(y + b_ref[...], act)
    o_ref[0] = y.reshape(th, ow, cout).astype(o_ref.dtype)


def conv3x3_direct(xp, wmat, b, act, out_dtype, th=None):
    """3x3/stride-1 conv on an already (+1,+1)-padded NHWC input; im2col,
    matmul, bias and activation fused into one Pallas kernel."""
    N, Hp, Wp, Cin = xp.shape
    OH, OW = Hp - 2, Wp - 2
    Cout = wmat.shape[1]
    if th is None:
        th = _pick_th(OH, OW)
    xp = xp.astype(jnp.bfloat16)
    wmat = wmat.astype(jnp.bfloat16)
    b2 = b.astype(jnp.float32).reshape(1, Cout)

    return pl.pallas_call(
        functools.partial(_conv3x3_kernel, th=th, ow=OW, act=act),
        out_shape=jax.ShapeDtypeStruct((N, OH, OW, Cout), out_dtype),
        grid_spec=pltpu.PrefetchScalarGridSpec(
            num_scalar_prefetch=0,
            grid=(N, OH // th),
            in_specs=[
                pl.BlockSpec((1, Hp, Wp, Cin), lambda n, i: (n, 0, 0, 0)),
                pl.BlockSpec((9 * Cin, Cout), lambda n, i: (0, 0)),
                pl.BlockSpec((1, Cout), lambda n, i: (0, 0)),
            ],
            out_specs=pl.BlockSpec((1, th, OW, Cout), lambda n, i: (n, i, 0, 0)),
        ),
        compiler_params=pltpu.CompilerParams(
            dimension_semantics=("parallel", "parallel"),
            vmem_limit_bytes=_VMEM_LIMIT),
    )(xp, wmat, b2)


# ----------------------------------------------------------------------------
# ConvTranspose2d(k=4, s=2, p=1) as ONE 3x3/stride-1 implicit GEMM producing
# 4*Cout "phase" channels, with the pixel-shuffle fused into the output store.
# ----------------------------------------------------------------------------
# Sub-pixel taps: for output row 2m+r, the live (3x3-window tap t, 4x4 kernel
# index k) pairs.  Window tap t reads padded row m+t (== input row m+t-1).
_PHASE_TAPS = {0: ((0, 3), (1, 1)),
               1: ((1, 2), (2, 0))}


def _fuse_convT_weight(w_iohw):
    """(Cin, Cout, 4, 4) torch ConvT weight -> (9*Cin, 4*Cout) fused 3x3 weight
    whose output columns are ordered (phase = 2*r + c, Cout)."""
    Cin, Cout, kh, kw = w_iohw.shape
    assert kh == 4 and kw == 4
    wf = jnp.zeros((3, 3, Cin, 4, Cout), w_iohw.dtype)
    for r in range(2):
        for c in range(2):
            ph = r * 2 + c
            for (t, a) in _PHASE_TAPS[r]:
                for (s, bb) in _PHASE_TAPS[c]:
                    wf = wf.at[t, s, :, ph, :].set(w_iohw[:, :, a, bb])
    return wf.reshape(9 * Cin, 4 * Cout)


def _convT_kernel(x_ref, w_ref, b_ref, o_ref, *, th, w, act):
    # x_ref: (1, H+2, W+2, Cin)     whole padded input image (resident over rows)
    # w_ref: (9*Cin, 4*Cout)        fused sub-pixel weight, columns = (phase, Cout)
    # b_ref: (1, 4*Cout)
    # o_ref: (1, th, 2, W, 2*Cout)  phase-separated output (r is dim 2)
    cin = x_ref.shape[3]
    phl = o_ref.shape[4]                        # 2*Cout = lanes of one output row
    r0 = pl.multiple_of(pl.program_id(1) * th, th)
    wins = []
    for dh in range(3):
        for dw in range(3):
            wins.append(x_ref[0, pl.ds(r0 + dh, th), pl.ds(dw, w), :])
    a = jnp.concatenate(wins, axis=2).reshape(th * w, 9 * cin)
    y = jnp.dot(a, w_ref[...], preferred_element_type=jnp.float32)
    y = _apply_act(y + b_ref[...], act)         # (th*w, 4*Cout)
    y = y.reshape(th, w, 2 * phl)
    # The phase-row slabs are plain lane-slices of the GEMM result; the
    # (m,r)/(p,c) interleave is realized by the output array's row-major
    # layout, so no in-kernel shuffle and no XLA pixel-shuffle is needed.
    o_ref[0, :, 0, :, :] = y[:, :, :phl].astype(o_ref.dtype)
    o_ref[0, :, 1, :, :] = y[:, :, phl:].astype(o_ref.dtype)


def conv_transpose2d(x_nhwc, w_iohw, b, act, out_dtype=jnp.bfloat16):
    """PyTorch ConvTranspose2d(k=4, s=2, p=1) semantics, NHWC data."""
    N, H, W, Cin = x_nhwc.shape
    Cin2, Cout = w_iohw.shape[0], w_iohw.shape[1]
    assert Cin == Cin2
    wf = _fuse_convT_weight(w_iohw).astype(jnp.bfloat16)      # (9*Cin, 4*Cout)
    bf = jnp.tile(b.astype(jnp.float32), 4).reshape(1, 4 * Cout)
    xp = jnp.pad(x_nhwc.astype(jnp.bfloat16),
                 ((0, 0), (1, 1), (1, 1), (0, 0)))
    th = _pick_th(H, W)

    y = pl.pallas_call(
        functools.partial(_convT_kernel, th=th, w=W, act=act),
        out_shape=jax.ShapeDtypeStruct((N, H, 2, W, 2 * Cout), out_dtype),
        grid_spec=pltpu.PrefetchScalarGridSpec(
            num_scalar_prefetch=0,
            grid=(N, H // th),
            in_specs=[
                pl.BlockSpec((1, H + 2, W + 2, Cin), lambda n, i: (n, 0, 0, 0)),
                pl.BlockSpec((9 * Cin, 4 * Cout), lambda n, i: (0, 0)),
                pl.BlockSpec((1, 4 * Cout), lambda n, i: (0, 0)),
            ],
            out_specs=pl.BlockSpec((1, th, 2, W, 2 * Cout),
                                   lambda n, i: (n, i, 0, 0, 0)),
        ),
        compiler_params=pltpu.CompilerParams(
            dimension_semantics=("parallel", "parallel"),
            vmem_limit_bytes=_VMEM_LIMIT),
    )(xp, wf, bf)

    # (N, H, 2, W, 2*Cout) -> (N, 2H, 2W, Cout): pure adjacent-dim merges, a
    # free (bitcast) reshape -- the pixel shuffle already happened in-kernel.
    return y.reshape(N, 2 * H, 2 * W, Cout)


# ----------------------------------------------------------------------------
# PyTorch-semantics Conv2d (encoder stride-2 convs via im2col+GEMM, the final
# stride-1 3x3 conv via the fused direct kernel)
# ----------------------------------------------------------------------------
def conv2d(x_nhwc, w_oihw, b, stride, pad, act, out_dtype=jnp.bfloat16):
    N, H, W, Cin = x_nhwc.shape
    Cout, Cin2, kh, kw = w_oihw.shape
    assert Cin == Cin2
    xp = jnp.pad(x_nhwc.astype(jnp.bfloat16),
                 ((0, 0), (pad, pad), (pad, pad), (0, 0)))
    OH = (H + 2 * pad - kh) // stride + 1
    OW = (W + 2 * pad - kw) // stride + 1
    wmat = jnp.transpose(w_oihw, (2, 3, 1, 0)).reshape(kh * kw * Cin, Cout)
    if stride == 1 and kh == 3 and kw == 3 and pad == 1:
        return conv3x3_direct(xp, wmat, b, act, out_dtype)
    cols = _im2col(xp, kh, kw, stride, OH, OW)
    y = matmul_bias_act(cols, wmat, b, act=act, out_dtype=out_dtype)
    return y.reshape(N, OH, OW, Cout)


# ----------------------------------------------------------------------------
# Parameter init (deterministic, synthetic; PyTorch tensor layouts)
# ----------------------------------------------------------------------------
def init_params(key, latent_dim):
    ks = iter(jax.random.split(key, 32))

    def conv_w(cout, cin, k):
        fan_in = cin * k * k
        return (jax.random.normal(next(ks), (cout, cin, k, k), jnp.float32)
                / jnp.sqrt(fan_in))

    def convT_w(cin, cout, k):
        fan_in = cin * k * k
        return (jax.random.normal(next(ks), (cin, cout, k, k), jnp.float32)
                / jnp.sqrt(fan_in))

    def lin_w(out_f, in_f):
        return (jax.random.normal(next(ks), (out_f, in_f), jnp.float32)
                / jnp.sqrt(in_f))

    def bias(n):
        return jax.random.normal(next(ks), (n,), jnp.float32) * 0.01

    p = {}
    p["e1_w"], p["e1_b"] = conv_w(32, 3, 3), bias(32)
    p["e2_w"], p["e2_b"] = conv_w(64, 32, 3), bias(64)
    p["e3_w"], p["e3_b"] = conv_w(64, 64, 3), bias(64)
    p["e4_w"], p["e4_b"] = conv_w(64, 64, 3), bias(64)
    p["e5_w"], p["e5_b"] = conv_w(64, 64, 3), bias(64)
    p["efc_w"], p["efc_b"] = lin_w(latent_dim, 8 * 7 * 64), bias(latent_dim)
    p["mean_w"], p["mean_b"] = lin_w(latent_dim, latent_dim), bias(latent_dim)
    p["lvar_w"], p["lvar_b"] = lin_w(latent_dim, latent_dim), bias(latent_dim)
    p["dfc_w"], p["dfc_b"] = lin_w(8 * 7 * 64, latent_dim), bias(8 * 7 * 64)
    p["d1_w"], p["d1_b"] = convT_w(64, 64, 4), bias(64)
    p["d2_w"], p["d2_b"] = convT_w(64, 64, 4), bias(64)
    p["d3_w"], p["d3_b"] = convT_w(64, 64, 4), bias(64)
    p["d4_w"], p["d4_b"] = convT_w(64, 64, 4), bias(64)
    p["d5_w"], p["d5_b"] = convT_w(64, 32, 4), bias(32)
    p["dout_w"], p["dout_b"] = conv_w(3, 32, 3), bias(3)
    return p


# ----------------------------------------------------------------------------
# Forward pass (mirrors VariationalAutoencoder.forward)
# ----------------------------------------------------------------------------
def vae_forward(params, x_nchw, rng):
    p = params
    N = x_nchw.shape[0]
    x = jnp.transpose(x_nchw, (0, 2, 3, 1)).astype(jnp.bfloat16)    # NCHW->NHWC

    # ----- encoder: 5 x (3x3 conv, stride 2) + LeakyReLU(0.1) -----
    h = conv2d(x, p["e1_w"], p["e1_b"], 2, 1, "leaky")
    h = conv2d(h, p["e2_w"], p["e2_b"], 2, 1, "leaky")
    h = conv2d(h, p["e3_w"], p["e3_b"], 2, 1, "leaky")
    h = conv2d(h, p["e4_w"], p["e4_b"], 2, 1, "leaky")
    h = conv2d(h, p["e5_w"], p["e5_b"], 2, 1, "leaky")               # (N, 8, 7, 64)
    # torch Flatten uses NCHW ordering (C, H, W)
    h = jnp.transpose(h, (0, 3, 1, 2)).reshape(N, 64 * 8 * 7)
    h = matmul_bias_act(h, p["efc_w"].T, p["efc_b"], act="leaky",
                        out_dtype=jnp.bfloat16)

    z_mean = matmul_bias_act(h, p["mean_w"].T, p["mean_b"], act=None,
                             out_dtype=jnp.float32)
    z_log_var = matmul_bias_act(h, p["lvar_w"].T, p["lvar_b"], act=None,
                                out_dtype=jnp.float32)

    # reparameterization trick (tiny elementwise op, left to XLA)
    eps = jax.random.normal(rng, z_mean.shape, jnp.float32)
    z = z_mean + jnp.exp(0.5 * z_log_var) * eps

    # ----- decoder -----
    d = matmul_bias_act(z.astype(jnp.bfloat16), p["dfc_w"].T, p["dfc_b"],
                        act="leaky", out_dtype=jnp.bfloat16)
    d = d.reshape(N, 64, 8, 7)                                       # torch Unflatten
    d = jnp.transpose(d, (0, 2, 3, 1))                               # -> NHWC
    d = conv_transpose2d(d, p["d1_w"], p["d1_b"], "leaky")           # (N, 16, 14, 64)
    d = conv_transpose2d(d, p["d2_w"], p["d2_b"], "leaky")           # (N, 32, 28, 64)
    d = conv_transpose2d(d, p["d3_w"], p["d3_b"], "leaky")           # (N, 64, 56, 64)
    d = conv_transpose2d(d, p["d4_w"], p["d4_b"], "leaky")           # (N, 128, 112, 64)
    d = conv_transpose2d(d, p["d5_w"], p["d5_b"], "leaky")           # (N, 256, 224, 32)
    d = conv2d(d, p["dout_w"], p["dout_b"], 1, 1, "sigmoid",
               out_dtype=jnp.float32)                                # (N, 256, 224, 3)
    d = jnp.transpose(d, (0, 3, 1, 2))                               # NHWC -> NCHW
    return d, z_mean, z_log_var


# ----------------------------------------------------------------------------
# f32 reference for ConvTranspose2d(k=4, s=2, p=1) to validate the sub-pixel
# decomposition and the fused pixel-shuffle store.
# ----------------------------------------------------------------------------
def _convT_reference_f32(x_nhwc, w_iohw, b, act):
    w = jnp.flip(w_iohw, axis=(2, 3)).astype(jnp.float32)   # transpose-conv flip
    w = jnp.transpose(w, (2, 3, 0, 1))                      # (kh, kw, Cin, Cout)
    y = jax.lax.conv_general_dilated(
        x_nhwc.astype(jnp.float32), w, window_strides=(1, 1),
        padding=((2, 2), (2, 2)), lhs_dilation=(2, 2),
        dimension_numbers=("NHWC", "HWIO", "NHWC"))
    y = y + b.reshape(1, 1, 1, -1).astype(jnp.float32)
    return _apply_act(y, act)


# ----------------------------------------------------------------------------
if __name__ == "__main__":
    latent_dim = 128
    batch = 2
    # Spatial size is dictated by the hard-coded Linear(8*7*64) / Unflatten(64,8,7)
    # in the reference module: 5 stride-2 convs require a 256x224 input.
    H, W = 256, 224

    key = jax.random.PRNGKey(0)
    k_params, k_data, k_eps, k_chk = jax.random.split(key, 4)

    # --- one-time validation of the fused ConvTranspose kernel (d1 shape) ---
    kc1, kc2, kc3 = jax.random.split(k_chk, 3)
    xt = jax.random.normal(kc1, (2, 8, 7, 64), jnp.float32)
    wt = 0.05 * jax.random.normal(kc2, (64, 64, 4, 4), jnp.float32)
    bt = 0.1 * jax.random.normal(kc3, (64,), jnp.float32)
    y_pl = conv_transpose2d(xt, wt, bt, "leaky", out_dtype=jnp.float32)
    y_rf = _convT_reference_f32(xt, wt, bt, "leaky")
    jax.block_until_ready((y_pl, y_rf))
    assert y_pl.shape == y_rf.shape == (2, 16, 14, 64), y_pl.shape
    rel = float(jnp.max(jnp.abs(y_pl - y_rf)) /
                (jnp.max(jnp.abs(y_rf)) + 1e-6))
    assert rel < 0.03, f"ConvTranspose kernel mismatch, rel err {rel}"

    # --- full forward pass ---
    params = init_params(k_params, latent_dim)
    x = jax.random.uniform(k_data, (batch, 3, H, W), jnp.float32)

    fwd = jax.jit(vae_forward)
    decoder_out, z_mean, z_log_var = fwd(params, x, k_eps)
    jax.block_until_ready((decoder_out, z_mean, z_log_var))

    assert decoder_out.shape == (batch, 3, H, W), decoder_out.shape
    assert z_mean.shape == (batch, latent_dim)
    assert z_log_var.shape == (batch, latent_dim)
    assert bool(jnp.all(jnp.isfinite(decoder_out)))
    assert bool(jnp.all((decoder_out >= 0.0) & (decoder_out <= 1.0)))
    print("KERNEL_OK")
</pallas_src>

<mosaic_0001>
module attributes {stable_mosaic.version = 11 : i64} {
  func.func @_convT_kernel(%arg0: i32, %arg1: i32, %arg2: memref<1x10x9x64xbf16, #tpu.memory_space<vmem>>, %arg3: memref<576x256xbf16, #tpu.memory_space<vmem>>, %arg4: memref<1x256xf32, #tpu.memory_space<vmem>>, %arg5: memref<1x8x2x7x128xf32, #tpu.memory_space<vmem>>) attributes {dimension_semantics = [#tpu.dimension_semantics<parallel>, #tpu.dimension_semantics<parallel>], iteration_bounds = array<i64: 2, 1>, scalar_prefetch = 0 : i64, scratch_operands = 0 : i64, tpu.core_type = #tpu.core_type<tc>, window_params = [{transform_indices = @transform_0, window_bounds = array<i64: 1, 10, 9, 64>}, {pipeline_mode = #tpu.pipeline_mode<synchronous>, transform_indices = @transform_1, window_bounds = array<i64: 576, 256>}, {pipeline_mode = #tpu.pipeline_mode<synchronous>, transform_indices = @transform_2, window_bounds = array<i64: 1, 256>}, {transform_indices = @transform_3, window_bounds = array<i64: 1, 8, 2, 7, 128>}]} {
    %c8_i32 = arith.constant 8 : i32
    %0 = arith.muli %arg1, %c8_i32 : i32
    %1 = tpu.assume_multiple %0, 8 : i32
    %c0_i32 = arith.constant 0 : i32
    %2 = arith.addi %1, %c0_i32 : i32
    %c0 = arith.constant 0 : index
    %3 = arith.index_cast %2 : i32 to index
    %c0_0 = arith.constant 0 : index
    %c0_1 = arith.constant 0 : index
    %4 = vector.load %arg2[%c0, %3, %c0_0, %c0_1] : memref<1x10x9x64xbf16, #tpu.memory_space<vmem>>, vector<1x8x7x64xbf16>
    %5 = vector.shape_cast %4 : vector<1x8x7x64xbf16> to vector<8x7x64xbf16>
    %c0_i32_2 = arith.constant 0 : i32
    %6 = arith.addi %1, %c0_i32_2 : i32
    %c0_3 = arith.constant 0 : index
    %7 = arith.index_cast %6 : i32 to index
    %c1 = arith.constant 1 : index
    %c0_4 = arith.constant 0 : index
    %8 = vector.load %arg2[%c0_3, %7, %c1, %c0_4] : memref<1x10x9x64xbf16, #tpu.memory_space<vmem>>, vector<1x8x7x64xbf16>
    %9 = vector.shape_cast %8 : vector<1x8x7x64xbf16> to vector<8x7x64xbf16>
    %c0_i32_5 = arith.constant 0 : i32
    %10 = arith.addi %1, %c0_i32_5 : i32
    %c0_6 = arith.constant 0 : index
    %11 = arith.index_cast %10 : i32 to index
    %c2 = arith.constant 2 : index
    %c0_7 = arith.constant 0 : index
    %12 = vector.load %arg2[%c0_6, %11, %c2, %c0_7] : memref<1x10x9x64xbf16, #tpu.memory_space<vmem>>, vector<1x8x7x64xbf16>
    %13 = vector.shape_cast %12 : vector<1x8x7x64xbf16> to vector<8x7x64xbf16>
    %c1_i32 = arith.constant 1 : i32
    %14 = arith.addi %1, %c1_i32 : i32
    %c0_8 = arith.constant 0 : index
    %15 = arith.index_cast %14 : i32 to index
    %c0_9 = arith.constant 0 : index
    %c0_10 = arith.constant 0 : index
    %16 = vector.load %arg2[%c0_8, %15, %c0_9, %c0_10] : memref<1x10x9x64xbf16, #tpu.memory_space<vmem>>, vector<1x8x7x64xbf16>
    %17 = vector.shape_cast %16 : vector<1x8x7x64xbf16> to vector<8x7x64xbf16>
    %c1_i32_11 = arith.constant 1 : i32
    %18 = arith.addi %1, %c1_i32_11 : i32
    %c0_12 = arith.constant 0 : index
    %19 = arith.index_cast %18 : i32 to index
    %c1_13 = arith.constant 1 : index
    %c0_14 = arith.constant 0 : index
    %20 = vector.load %arg2[%c0_12, %19, %c1_13, %c0_14] : memref<1x10x9x64xbf16, #tpu.memory_space<vmem>>, vector<1x8x7x64xbf16>
    %21 = vector.shape_cast %20 : vector<1x8x7x64xbf16> to vector<8x7x64xbf16>
    %c1_i32_15 = arith.constant 1 : i32
    %22 = arith.addi %1, %c1_i32_15 : i32
    %c0_16 = arith.constant 0 : index
    %23 = arith.index_cast %22 : i32 to index
    %c2_17 = arith.constant 2 : index
    %c0_18 = arith.constant 0 : index
    %24 = vector.load %arg2[%c0_16, %23, %c2_17, %c0_18] : memref<1x10x9x64xbf16, #tpu.memory_space<vmem>>, vector<1x8x7x64xbf16>
    %25 = vector.shape_cast %24 : vector<1x8x7x64xbf16> to vector<8x7x64xbf16>
    %c2_i32 = arith.constant 2 : i32
    %26 = arith.addi %1, %c2_i32 : i32
    %c0_19 = arith.constant 0 : index
    %27 = arith.index_cast %26 : i32 to index
    %c0_20 = arith.constant 0 : index
    %c0_21 = arith.constant 0 : index
    %28 = vector.load %arg2[%c0_19, %27, %c0_20, %c0_21] : memref<1x10x9x64xbf16, #tpu.memory_space<vmem>>, vector<1x8x7x64xbf16>
    %29 = vector.shape_cast %28 : vector<1x8x7x64xbf16> to vector<8x7x64xbf16>
    %c2_i32_22 = arith.constant 2 : i32
    %30 = arith.addi %1, %c2_i32_22 : i32
    %c0_23 = arith.constant 0 : index
    %31 = arith.index_cast %30 : i32 to index
    %c1_24 = arith.constant 1 : index
    %c0_25 = arith.constant 0 : index
    %32 = vector.load %arg2[%c0_23, %31, %c1_24, %c0_25] : memref<1x10x9x64xbf16, #tpu.memory_space<vmem>>, vector<1x8x7x64xbf16>
    %33 = vector.shape_cast %32 : vector<1x8x7x64xbf16> to vector<8x7x64xbf16>
    %c2_i32_26 = arith.constant 2 : i32
    %34 = arith.addi %1, %c2_i32_26 : i32
    %c0_27 = arith.constant 0 : index
    %35 = arith.index_cast %34 : i32 to index
    %c2_28 = arith.constant 2 : index
    %c0_29 = arith.constant 0 : index
    %36 = vector.load %arg2[%c0_27, %35, %c2_28, %c0_29] : memref<1x10x9x64xbf16, #tpu.memory_space<vmem>>, vector<1x8x7x64xbf16>
    %37 = vector.shape_cast %36 : vector<1x8x7x64xbf16> to vector<8x7x64xbf16>
    %38 = tpu.concatenate %5, %9, %13, %17, %21, %25, %29, %33, %37 in 2 : vector<8x7x64xbf16>, vector<8x7x64xbf16>, vector<8x7x64xbf16>, vector<8x7x64xbf16>, vector<8x7x64xbf16>, vector<8x7x64xbf16>, vector<8x7x64xbf16>, vector<8x7x64xbf16>, vector<8x7x64xbf16> -> vector<8x7x576xbf16>
    %39 = vector.shape_cast %38 : vector<8x7x576xbf16> to vector<56x576xbf16>
    %c0_30 = arith.constant 0 : index
    %c0_31 = arith.constant 0 : index
    %40 = vector.load %arg3[%c0_30, %c0_31] : memref<576x256xbf16, #tpu.memory_space<vmem>>, vector<576x256xbf16>
    %cst = arith.constant dense<0.000000e+00> : vector<56x256xf32>
    %41 = tpu.matmul %39, %40, %cst {dimension_numbers = #tpu.dot_dimension_numbers<[1], [0], [0], [1], [0, 0, 1, 1], [], []>} : vector<56x576xbf16>, vector<576x256xbf16>, vector<56x256xf32> -> vector<56x256xf32>
    %c0_32 = arith.constant 0 : index
    %c0_33 = arith.constant 0 : index
    %42 = vector.load %arg4[%c0_32, %c0_33] : memref<1x256xf32, #tpu.memory_space<vmem>>, vector<1x256xf32>
    %43 = vector.broadcast %42 : vector<1x256xf32> to vector<56x256xf32>
    %44 = arith.addf %41, %43 : vector<56x256xf32>
    %cst_34 = arith.constant 0.000000e+00 : f32
    %45 = vector.broadcast %cst_34 : f32 to vector<56x256xf32>
    %46 = arith.cmpf ogt, %44, %45 : vector<56x256xf32>
    %cst_35 = arith.constant 1.000000e-01 : f32
    %47 = vector.broadcast %cst_35 : f32 to vector<56x256xf32>
    %48 = arith.mulf %47, %44 : vector<56x256xf32>
    %49 = arith.select %46, %44, %48 : vector<56x256xi1>, vector<56x256xf32>
    %50 = vector.shape_cast %49 : vector<56x256xf32> to vector<8x7x256xf32>
    %51 = vector.extract_strided_slice %50 {offsets = [0, 0, 0], sizes = [8, 7, 128], strides = [1, 1, 1]} : vector<8x7x256xf32> to vector<8x7x128xf32>
    %c0_36 = arith.constant 0 : index
    %c0_37 = arith.constant 0 : index
    %c0_38 = arith.constant 0 : index
    %c0_39 = arith.constant 0 : index
    %c0_40 = arith.constant 0 : index
    %52 = vector.load %arg5[%c0_36, %c0_37, %c0_38, %c0_39, %c0_40] : memref<1x8x2x7x128xf32, #tpu.memory_space<vmem>>, vector<1x8x1x7x128xf32>
    %53 = vector.shape_cast %52 : vector<1x8x1x7x128xf32> to vector<8x7x128xf32>
    %54 = vector.shape_cast %51 : vector<8x7x128xf32> to vector<1x8x1x7x128xf32>
    tpu.vector_store %arg5[%c0_36, %c0_37, %c0_38, %c0_39, %c0_40], %54 {strides = array<i32>} : memref<1x8x2x7x128xf32, #tpu.memory_space<vmem>>, vector<1x8x1x7x128xf32>,
    %55 = vector.extract_strided_slice %50 {offsets = [0, 0, 128], sizes = [8, 7, 128], strides = [1, 1, 1]} : vector<8x7x256xf32> to vector<8x7x128xf32>
    %c0_41 = arith.constant 0 : index
    %c0_42 = arith.constant 0 : index
    %c1_43 = arith.constant 1 : index
    %c0_44 = arith.constant 0 : index
    %c0_45 = arith.constant 0 : index
    %56 = vector.load %arg5[%c0_41, %c0_42, %c1_43, %c0_44, %c0_45] : memref<1x8x2x7x128xf32, #tpu.memory_space<vmem>>, vector<1x8x1x7x128xf32>
    %57 = vector.shape_cast %56 : vector<1x8x1x7x128xf32> to vector<8x7x128xf32>
    %58 = vector.shape_cast %55 : vector<8x7x128xf32> to vector<1x8x1x7x128xf32>
    tpu.vector_store %arg5[%c0_41, %c0_42, %c1_43, %c0_44, %c0_45], %58 {strides = array<i32>} : memref<1x8x2x7x128xf32, #tpu.memory_space<vmem>>, vector<1x8x1x7x128xf32>,
    return
  }
  func.func @transform_0(%arg0: i32, %arg1: i32) -> (i32, i32, i32, i32) {
    %c0_i32 = arith.constant 0 : i32
    %c0_i32_0 = arith.constant 0 : i32
    %c0_i32_1 = arith.constant 0 : i32
    %c0_i32_2 = arith.constant 0 : i32
    return %arg0, %c0_i32, %c0_i32_0, %c0_i32_1 : i32, i32, i32, i32
  }
  func.func @transform_1(%arg0: i32, %arg1: i32) -> (i32, i32) {
    %c0_i32 = arith.constant 0 : i32
    %c0_i32_0 = arith.constant 0 : i32
    %c0_i32_1 = arith.constant 0 : i32
    return %c0_i32, %c0_i32_0 : i32, i32
  }
  func.func @transform_2(%arg0: i32, %arg1: i32) -> (i32, i32) {
    %c0_i32 = arith.constant 0 : i32
    %c0_i32_0 = arith.constant 0 : i32
    %c0_i32_1 = arith.constant 0 : i32
    return %c0_i32, %c0_i32_0 : i32, i32
  }
  func.func @transform_3(%arg0: i32, %arg1: i32) -> (i32, i32, i32, i32, i32) {
    %c0_i32 = arith.constant 0 : i32
    %c0_i32_0 = arith.constant 0 : i32
    %c0_i32_1 = arith.constant 0 : i32
    %c0_i32_2 = arith.constant 0 : i32
    return %arg0, %arg1, %c0_i32, %c0_i32_0, %c0_i32_1 : i32, i32, i32, i32, i32
  }
}

</mosaic_0001>

<llo_original>
// kernel: tpu_custom_call.1
$region0: #{tpu_custom_call.1}
  #allocation0 [shape = 'u32[]', space=smem, size = 0x4, offset = 0x4, fixed_abs, tag = 'smem constant byte address 0x4 - core index']
  #allocation1 [shape = 'u32[72,128]{1,0:T(1,128)}', space=vmem, size = 0x9000, scoped, tag = 'internal scratch']
  %s0 = inlined_call_operand.vmem [shape: bf16[2,10,9,64], index: 0, kind: input, shape index: {}]
  %s1 = inlined_call_operand.hbm [shape: bf16[576,256], index: 1, kind: input, shape index: {}]
  %s2 = inlined_call_operand.vmem [shape: f32[1,256], index: 2, kind: input, shape index: {}]
  %s3 = inlined_call_operand.vmem [shape: f32[2,8,2,7,128], index: 3, kind: output, shape index: {}]
  %s4 = sld [smem:[#allocation0]]
  $region49: #{tpu_custom_call.1} parent=0
    _
  %s6 = ssub.s32 1, %s4
  %s7 = scalar_select 0, %s6, %s4
  $region1: #{tpu_custom_call.1} parent=0
    #allocation2 [shape = 'u8[294912]{0}', space=vmem, size = 0x48000, scoped, tag = 'input window, operand 1, single buffered']
    #allocation3 [shape = 's32[2]{0}', space=sflag, size = 0x8, scoped, tag = 'scoped memory for tpu_custom_call.1']
    %8 = vsyncpa [#allocation3], 0
    loop: start=0, step=1, limit=4
    $region2: #{tpu_custom_call.1} parent=1 // loop_pre_header
      _
    $region3: #{tpu_custom_call.1} parent=1 // loop_header
      %s10 = sphi 0, %s14
      %p11 = scmp.ge.s32.totalorder %s10, 4
      %s17 = sphi 0, %s29
      %s18 = sphi 0, %s25
      %s19 = sphi 0, %s17
      %s20 = sphi 0, %s18
      %s21 = sphi 0, %s19
      %s22 = sphi 0, %s20
      %s32 = sphi 0, %s34
      %s35 = sphi 0, %s32
      %s36 = sphi 0, %s35
      %s52 = sphi 0, %s36
      %s56 = sphi 0, %s56
      %s58 = sphi 0, %s56
      %s59 = sphi 0, %s58
      %s73 = sphi 0, %s59
      %s77 = sphi 0, %s77
      %s79 = sphi 0, %s77
      %s80 = sphi 0, %s79
      %s94 = sphi 0, %s80
      %s102 = sphi 0, %s104
      %s105 = sphi 0, %s102
      %s106 = sphi 0, %s105
      %s122 = sphi 0, %s106
    $region4: #{tpu_custom_call.1} parent=1 // loop_header_branch
      %13 = sbr.rel (%p11) target = $region8
    $region5: #{tpu_custom_call.1} parent=1 // loop_body
      %s15 = ssub.s32 %s10, 1
      %s16 = ssub.s32 %s10, 2
      %s23 = sadd.s32 1, %s18
      %p24 = scmp.ge.s32.totalorder %s23, 1
      %s25 = scalar_select %p24, 0, %s23
      %s26 = sadd.s32 1, %s17
      %s27 = scalar_select %p24, %s26, %s17
      %p28 = scmp.ge.s32.totalorder %s27, 2
      %s29 = scalar_select %p28, 0, %s27
      %s30 = ssub.s32 %s17, %s29
      %p31 = scmp.eq.s32.totalorder %s30, 0
      %s33 = sadd.s32 %s32, 1
      %s34 = scalar_select %p31, %s32, %s33
      %p37 = pneg %p31
      %p38 = scmp.eq.s32.totalorder %s10, 1
      %p39 = por %p37, %p38
      %p40 = scmp.ne.s32.totalorder %s32, %s35
      %p41 = scmp.eq.s32.totalorder %s10, 0
      %p42 = por %p40, %p41
      %p43 = scmp.ne.s32.totalorder %s32, %s35
      %p44 = scmp.eq.s32.totalorder %s15, 1
      %p45 = por %p43, %p44
      %p46 = scmp.ne.s32.totalorder %s35, %s36
      %p47 = scmp.eq.s32.totalorder %s15, 0
      %p48 = por %p46, %p47
      %p49 = scmp.ne.s32.totalorder %s35, %s36
      %p50 = scmp.eq.s32.totalorder %s16, 1
      %p51 = por %p49, %p50
      %p53 = scmp.ne.s32.totalorder %s36, %s52
      %p54 = scmp.eq.s32.totalorder %s16, 0
      %p55 = por %p53, %p54
      %s57 = sadd.s32 %s56, 1
      %p60 = scmp.eq.s32.totalorder %s10, 1
      %p61 = scmp.ne.s32.totalorder %s56, %s58
      %p62 = scmp.eq.s32.totalorder %s10, 0
      %p63 = por %p61, %p62
      %p64 = scmp.ne.s32.totalorder %s56, %s58
      %p65 = scmp.eq.s32.totalorder %s15, 1
      %p66 = por %p64, %p65
      %p67 = scmp.ne.s32.totalorder %s58, %s59
      %p68 = scmp.eq.s32.totalorder %s15, 0
      %p69 = por %p67, %p68
      %p70 = scmp.ne.s32.totalorder %s58, %s59
      %p71 = scmp.eq.s32.totalorder %s16, 1
      %p72 = por %p70, %p71
      %p74 = scmp.ne.s32.totalorder %s59, %s73
      %p75 = scmp.eq.s32.totalorder %s16, 0
      %p76 = por %p74, %p75
      %s78 = sadd.s32 %s77, 1
      %p81 = scmp.eq.s32.totalorder %s10, 1
      %p82 = scmp.ne.s32.totalorder %s77, %s79
      %p83 = scmp.eq.s32.totalorder %s10, 0
      %p84 = por %p82, %p83
      %p85 = scmp.ne.s32.totalorder %s77, %s79
      %p86 = scmp.eq.s32.totalorder %s15, 1
      %p87 = por %p85, %p86
      %p88 = scmp.ne.s32.totalorder %s79, %s80
      %p89 = scmp.eq.s32.totalorder %s15, 0
      %p90 = por %p88, %p89
      %p91 = scmp.ne.s32.totalorder %s79, %s80
      %p92 = scmp.eq.s32.totalorder %s16, 1
      %p93 = por %p91, %p92
      %p95 = scmp.ne.s32.totalorder %s80, %s94
      %p96 = scmp.eq.s32.totalorder %s16, 0
      %p97 = por %p95, %p96
      %s98 = ssub.s32 %s17, %s29
      %s99 = ssub.s32 %s18, %s25
      %s100 = sor.u32 %s98, %s99
      %p101 = scmp.eq.s32.totalorder %s100, 0
      %s103 = sadd.s32 %s102, 1
      %s104 = scalar_select %p101, %s102, %s103
      %p107 = pneg %p101
      %p108 = scmp.eq.s32.totalorder %s10, 1
      %p109 = por %p107, %p108
      %p110 = scmp.ne.s32.totalorder %s102, %s105
      %p111 = scmp.eq.s32.totalorder %s10, 0
      %p112 = por %p110, %p111
      %p113 = scmp.ne.s32.totalorder %s102, %s105
      %p114 = scmp.eq.s32.totalorder %s15, 1
      %p115 = por %p113, %p114
      %p116 = scmp.ne.s32.totalorder %s105, %s106
      %p117 = scmp.eq.s32.totalorder %s15, 0
      %p118 = por %p116, %p117
      %p119 = scmp.ne.s32.totalorder %s105, %s106
      %p120 = scmp.eq.s32.totalorder %s16, 1
      %p121 = por %p119, %p120
      %p123 = scmp.ne.s32.totalorder %s106, %s122
      %p124 = scmp.eq.s32.totalorder %s16, 0
      %p125 = por %p123, %p124
      %p126 = scmp.le.s32.totalorder 1, %s10
      %p127 = scmp.lt.s32.totalorder %s10, 3
      %p128 = pnand %p126, %p127
      %p129 = pneg %p128
      // Predicated region
      $region9: #{tpu_custom_call.1} parent=5 // pred_check
        _
      $region10: #{tpu_custom_call.1} parent=5 // pred_check_branch
        %131 = sbr.rel (%p128) target = $region12
      $region11: #{tpu_custom_call.1} parent=5 // pred_region
        %s132 = ssub.s32 %s10, 1
        // Predicated region
        $region13: #{tpu_custom_call.1} parent=11 // pred_check
          %p133 = pneg %p69
        $region14: #{tpu_custom_call.1} parent=11 // pred_check_branch
          %135 = sbr.rel (%p133) target = $region16
        $region15: #{tpu_custom_call.1} parent=11 // pred_region
          %137 = vsyncadd [#allocation3], 0
          %s138 = sshll.u32 %s1, 4
          %s139 = int_to_ptr.hbm [resolvable:$true] %s138
          %s140 = sshll.u32 [#allocation2], 4
          %s141 = int_to_ptr.vmem [resolvable:$true] %s140
          %146 = dma.hbm_to_vmem [thread:$0]  %s139, 9216, %s141, [#allocation3], 128, 128, 8
        $region16: #{tpu_custom_call.1} parent=11 // pred_fallthru
          _
        // Predicated region
        $region17: #{tpu_custom_call.1} parent=11 // pred_check
          %p147 = pneg %p90
        $region18: #{tpu_custom_call.1} parent=11 // pred_check_branch
          %149 = sbr.rel (%p147) target = $region20
        $region19: #{tpu_custom_call.1} parent=11 // pred_region
          _
        $region20: #{tpu_custom_call.1} parent=11 // pred_fallthru
          _
      $region12: #{tpu_custom_call.1} parent=5 // pred_fallthru
        _
      %p150 = scmp.lt.s32.totalorder %s10, 2
      // Predicated region
      $region21: #{tpu_custom_call.1} parent=5 // pred_check
        %p151 = pneg %p150
      $region22: #{tpu_custom_call.1} parent=5 // pred_check_branch
        %153 = sbr.rel (%p151) target = $region24
      $region23: #{tpu_custom_call.1} parent=5 // pred_region
        // Predicated region
        $region25: #{tpu_custom_call.1} parent=23 // pred_check
          %p154 = pneg %p42
        $region26: #{tpu_custom_call.1} parent=23 // pred_check_branch
          %156 = sbr.rel (%p154) target = $region28
        $region27: #{tpu_custom_call.1} parent=23 // pred_region
          %p157 = scmp.lt.s32.totalorder %s17, 1
          %s158 = scalar_select %p157, %s17, 1
          %s159 = smul.addr %s158, 20
          %s160 = smul.addr %s159, 4
          %s161 = scalar_lea.vmem %s0, %s160
        $region28: #{tpu_custom_call.1} parent=23 // pred_fallthru
          _
      $region24: #{tpu_custom_call.1} parent=5 // pred_fallthru
        _
      %p162 = scmp.le.s32.totalorder 1, %s10
      %p163 = scmp.lt.s32.totalorder %s10, 3
      %p164 = pnand %p162, %p163
      %p165 = pneg %p164
      // Predicated region
      $region29: #{tpu_custom_call.1} parent=5 // pred_check
        _
      $region30: #{tpu_custom_call.1} parent=5 // pred_check_branch
        %167 = sbr.rel (%p164) target = $region32
      $region31: #{tpu_custom_call.1} parent=5 // pred_region
        %s168 = ssub.s32 %s10, 1
        // Predicated region
        $region33: #{tpu_custom_call.1} parent=31 // pred_check
          %p169 = pneg %p69
        $region34: #{tpu_custom_call.1} parent=31 // pred_check_branch
          %171 = sbr.rel (%p169) target = $region36
        $region35: #{tpu_custom_call.1} parent=31 // pred_region
          %173 = dma.done [#allocation3], 9216
        $region36: #{tpu_custom_call.1} parent=31 // pred_fallthru
          _
        %p174 = scmp.lt.s32.totalorder %s19, 1
        %s175 = scalar_select %p174, %s19, 1
        %s176 = smul.addr %s175, 20
        %s177 = smul.addr %s176, 4
        %s178 = scalar_lea.vmem %s0, %s177
        %p179 = pneg %p48
        %p180 = pneg %p45
        %p181 = pneg %p69
        %p182 = pneg %p66
        %p183 = pneg %p90
        %p184 = pneg %p87
        %p185 = pneg %p118
        %p186 = pneg %p115
        %s187 = smul.u32 8, %s20
        %p188 = scmp.lt.s32.totalorder %s19, 1
        %s189 = scalar_select %p188, %s19, 1
        %p190 = scmp.lt.s32.totalorder %s187, 7
        %s191 = scalar_select %p190, %s187, 7
        %s192 = smul.addr %s191, 2
        %s193 = smul.addr %s189, 16
        %s194 = sadd.s32 %s192, %s193
        %s195 = smul.addr %s194, 8
        %s196 = scalar_lea.vmem %s3, %s195
        %p197 = scmp.lt.s32.totalorder %s19, 1
        %s198 = scalar_select %p197, %s19, 1
        %s199 = smul.addr %s198, 20
        %s200 = smul.addr %s199, 4
        %s201 = scalar_lea.vmem %s0, %s200
        %s202 = smul.u32 8, %s20
        %p203 = scmp.lt.s32.totalorder %s19, 1
        %s204 = scalar_select %p203, %s19, 1
        %p205 = scmp.lt.s32.totalorder %s202, 7
        %s206 = scalar_select %p205, %s202, 7
        %s207 = smul.addr %s206, 2
        %s208 = smul.addr %s204, 16
        %s209 = sadd.s32 %s207, %s208
        %s210 = smul.addr %s209, 8
        %s211 = scalar_lea.vmem %s3, %s210
        %s212 = smul.u32 8, %s20
        %s214 = smul.u32 %s20, 8
        %s215 = smul.u32 %s214, 2
        %s216 = smul.addr %s215, 4
        %s217 = scalar_lea.vmem %s201, %s216
        %v218 = vld [vmem:[%s217] sm:$0xf]
        %v219 = vld [vmem:[%s217 + $0x8] sm:$0xf]
        %v220 = vld [vmem:[%s217 + $0x10] sm:$0xf]
        %v221 = vld [vmem:[%s217 + $0x18] sm:$0xf]
        %v222 = vld [vmem:[%s217 + $0x20] sm:$0xf]
        %v223 = vld [vmem:[%s217 + $0x28] sm:$0xf]
        %v224 = vld [vmem:[%s217 + $0x30] sm:$0xf]
        %v225 = vld [vmem:[%s217 + $0x38] sm:$0xf]
        %v226 = vld [vmem:[%s217] sm:$0xe]
        %v227 = vld [vmem:[%s217 + $0x4] sm:$0x1]
        %v228 = vld [vmem:[%s217 + $0x8] sm:$0xe]
        %v229 = vld [vmem:[%s217 + $0xc] sm:$0x1]
        %v230 = vld [vmem:[%s217 + $0x10] sm:$0xe]
        %v231 = vld [vmem:[%s217 + $0x14] sm:$0x1]
        %v232 = vld [vmem:[%s217 + $0x18] sm:$0xe]
        %v233 = vld [vmem:[%s217 + $0x1c] sm:$0x1]
        %v234 = vld [vmem:[%s217 + $0x20] sm:$0xe]
        %v235 = vld [vmem:[%s217 + $0x24] sm:$0x1]
        %v236 = vld [vmem:[%s217 + $0x28] sm:$0xe]
        %v237 = vld [vmem:[%s217 + $0x2c] sm:$0x1]
        %v238 = vld [vmem:[%s217 + $0x30] sm:$0xe]
        %v239 = vld [vmem:[%s217 + $0x34] sm:$0x1]
        %v240 = vld [vmem:[%s217 + $0x38] sm:$0xe]
        %v241 = vld [vmem:[%s217 + $0x3c] sm:$0x1]
        %s242 = sadd.s32 %s214, 1
        %s243 = smul.u32 %s242, 2
        %s244 = smul.addr %s243, 4
        %s245 = scalar_lea.vmem %s201, %s244
        %v246 = vld [vmem:[%s245] sm:$0xf]
        %v247 = vld [vmem:[%s245 + $0x8] sm:$0xf]
        %v248 = vld [vmem:[%s245 + $0x10] sm:$0xf]
        %v249 = vld [vmem:[%s245 + $0x18] sm:$0xf]
        %v250 = vld [vmem:[%s245 + $0x20] sm:$0xf]
        %v251 = vld [vmem:[%s245 + $0x28] sm:$0xf]
        %v252 = vld [vmem:[%s245 + $0x30] sm:$0xf]
        %v253 = vld [vmem:[%s245 + $0x38] sm:$0xf]
        %v254 = vld [vmem:[%s245] sm:$0xe]
        %v255 = vld [vmem:[%s245 + $0x4] sm:$0x1]
        %v256 = vld [vmem:[%s245 + $0x8] sm:$0xe]
        %v257 = vld [vmem:[%s245 + $0xc] sm:$0x1]
        %v258 = vld [vmem:[%s245 + $0x10] sm:$0xe]
        %v259 = vld [vmem:[%s245 + $0x14] sm:$0x1]
        %v260 = vld [vmem:[%s245 + $0x18] sm:$0xe]
        %v261 = vld [vmem:[%s245 + $0x1c] sm:$0x1]
        %v262 = vld [vmem:[%s245 + $0x20] sm:$0xe]
        %v263 = vld [vmem:[%s245 + $0x24] sm:$0x1]
        %v264 = vld [vmem:[%s245 + $0x28] sm:$0xe]
        %v265 = vld [vmem:[%s245 + $0x2c] sm:$0x1]
        %v266 = vld [vmem:[%s245 + $0x30] sm:$0xe]
        %v267 = vld [vmem:[%s245 + $0x34] sm:$0x1]
        %v268 = vld [vmem:[%s245 + $0x38] sm:$0xe]
        %v269 = vld [vmem:[%s245 + $0x3c] sm:$0x1]
        %s270 = sadd.s32 %s214, 2
        %s271 = smul.u32 %s270, 2
        %s272 = smul.addr %s271, 4
        %s273 = scalar_lea.vmem %s201, %s272
        %v274 = vld [vmem:[%s273] sm:$0xf]
        %v275 = vld [vmem:[%s273 + $0x8] sm:$0xf]
        %v276 = vld [vmem:[%s273 + $0x10] sm:$0xf]
        %v277 = vld [vmem:[%s273 + $0x18] sm:$0xf]
        %v278 = vld [vmem:[%s273 + $0x20] sm:$0xf]
        %v279 = vld [vmem:[%s273 + $0x28] sm:$0xf]
        %v280 = vld [vmem:[%s273 + $0x30] sm:$0xf]
        %v281 = vld [vmem:[%s273 + $0x38] sm:$0xf]
        %v282 = vld [vmem:[%s273] sm:$0xe]
        %v283 = vld [vmem:[%s273 + $0x4] sm:$0x1]
        %v284 = vld [vmem:[%s273 + $0x8] sm:$0xe]
        %v285 = vld [vmem:[%s273 + $0xc] sm:$0x1]
        %v286 = vld [vmem:[%s273 + $0x10] sm:$0xe]
        %v287 = vld [vmem:[%s273 + $0x14] sm:$0x1]
        %v288 = vld [vmem:[%s273 + $0x18] sm:$0xe]
        %v289 = vld [vmem:[%s273 + $0x1c] sm:$0x1]
        %v290 = vld [vmem:[%s273 + $0x20] sm:$0xe]
        %v291 = vld [vmem:[%s273 + $0x24] sm:$0x1]
        %v292 = vld [vmem:[%s273 + $0x28] sm:$0xe]
        %v293 = vld [vmem:[%s273 + $0x2c] sm:$0x1]
        %v294 = vld [vmem:[%s273 + $0x30] sm:$0xe]
        %v295 = vld [vmem:[%s273 + $0x34] sm:$0x1]
        %v296 = vld [vmem:[%s273 + $0x38] sm:$0xe]
        %v297 = vld [vmem:[%s273 + $0x3c] sm:$0x1]
        %v306 = vunpack.c.l.b16 %v218
        %v307 = vunpack.c.l.b16 %v219
        %v308 = vunpack.c.l.b16 %v220
        %v309 = vunpack.c.l.b16 %v221
        %v310 = vunpack.c.l.b16 %v222
        %v311 = vunpack.c.l.b16 %v223
        %v312 = vunpack.c.l.b16 %v224
        %v313 = vunpack.c.l.b16 %v225
        %v314 = vpack.c.b16 %v306, %v306
        %v315 = vpack.c.b16 %v307, %v307
        %v316 = vpack.c.b16 %v308, %v308
        %v317 = vpack.c.b16 %v309, %v309
        %v318 = vpack.c.b16 %v310, %v310
        %v319 = vpack.c.b16 %v311, %v311
        %v320 = vpack.c.b16 %v312, %v312
        %v321 = vpack.c.b16 %v313, %v313
        %v323 = vshrl.u32 %v314, 16
        %v325 = vshll.u32 %v314, 16
        %v327 = vrot.slane %v325, 1
        %v328 = vor.u32 %v323, %v327
        %v330 = vshrl.u32 %v315, 16
        %v332 = vshll.u32 %v315, 16
        %v334 = vrot.slane %v332, 1
        %v335 = vor.u32 %v330, %v334
        %v337 = vshrl.u32 %v316, 16
        %v339 = vshll.u32 %v316, 16
        %v341 = vrot.slane %v339, 1
        %v342 = vor.u32 %v337, %v341
        %v344 = vshrl.u32 %v317, 16
        %v346 = vshll.u32 %v317, 16
        %v348 = vrot.slane %v346, 1
        %v349 = vor.u32 %v344, %v348
        %v351 = vshrl.u32 %v318, 16
        %v353 = vshll.u32 %v318, 16
        %v355 = vrot.slane %v353, 1
        %v356 = vor.u32 %v351, %v355
        %v358 = vshrl.u32 %v319, 16
        %v360 = vshll.u32 %v319, 16
        %v362 = vrot.slane %v360, 1
        %v363 = vor.u32 %v358, %v362
        %v365 = vshrl.u32 %v320, 16
        %v367 = vshll.u32 %v320, 16
        %v369 = vrot.slane %v367, 1
        %v370 = vor.u32 %v365, %v369
        %v372 = vshrl.u32 %v321, 16
        %v374 = vshll.u32 %v321, 16
        %v376 = vrot.slane %v374, 1
        %v377 = vor.u32 %v372, %v376
        %378 = vrot.lane.b32.xlu0 %v328, 64
        %v379 = vpop.permute.xlu0 %378
        %380 = vrot.lane.b32.xlu0 %v335, 64
        %v381 = vpop.permute.xlu0 %380
        %382 = vrot.lane.b32.xlu0 %v342, 64
        %v383 = vpop.permute.xlu0 %382
        %384 = vrot.lane.b32.xlu0 %v349, 64
        %v385 = vpop.permute.xlu0 %384
        %386 = vrot.lane.b32.xlu0 %v356, 64
        %v387 = vpop.permute.xlu0 %386
        %388 = vrot.lane.b32.xlu0 %v363, 64
        %v389 = vpop.permute.xlu0 %388
        %390 = vrot.lane.b32.xlu0 %v370, 64
        %v391 = vpop.permute.xlu0 %390
        %392 = vrot.lane.b32.xlu0 %v377, 64
        %v393 = vpop.permute.xlu0 %392
        %v410 = vunpack.c.l.b16 %v226
        %v411 = vunpack.c.l.b16 %v227
        %v412 = vunpack.c.l.b16 %v228
        %v413 = vunpack.c.l.b16 %v229
        %v414 = vunpack.c.l.b16 %v230
        %v415 = vunpack.c.l.b16 %v231
        %v416 = vunpack.c.l.b16 %v232
        %v417 = vunpack.c.l.b16 %v233
        %v418 = vunpack.c.l.b16 %v234
        %v419 = vunpack.c.l.b16 %v235
        %v420 = vunpack.c.l.b16 %v236
        %v421 = vunpack.c.l.b16 %v237
        %v422 = vunpack.c.l.b16 %v238
        %v423 = vunpack.c.l.b16 %v239
        %v424 = vunpack.c.l.b16 %v240
        %v425 = vunpack.c.l.b16 %v241
        %v426 = vpack.c.b16 %v411, %v410
        %v427 = vpack.c.b16 %v413, %v412
        %v428 = vpack.c.b16 %v415, %v414
        %v429 = vpack.c.b16 %v417, %v416
        %v430 = vpack.c.b16 %v419, %v418
        %v431 = vpack.c.b16 %v421, %v420
        %v432 = vpack.c.b16 %v423, %v422
        %v433 = vpack.c.b16 %v425, %v424
        %v434 = vrot.slane %v426, 1
        %v435 = vrot.slane %v427, 1
        %v436 = vrot.slane %v428, 1
        %v437 = vrot.slane %v429, 1
        %v438 = vrot.slane %v430, 1
        %v439 = vrot.slane %v431, 1
        %v440 = vrot.slane %v432, 1
        %v441 = vrot.slane %v433, 1
        %v450 = vunpack.c.l.b16 %v246
        %v451 = vunpack.c.l.b16 %v247
        %v452 = vunpack.c.l.b16 %v248
        %v453 = vunpack.c.l.b16 %v249
        %v454 = vunpack.c.l.b16 %v250
        %v455 = vunpack.c.l.b16 %v251
        %v456 = vunpack.c.l.b16 %v252
        %v457 = vunpack.c.l.b16 %v253
        %v458 = vpack.c.b16 %v450, %v450
        %v459 = vpack.c.b16 %v451, %v451
        %v460 = vpack.c.b16 %v452, %v452
        %v461 = vpack.c.b16 %v453, %v453
        %v462 = vpack.c.b16 %v454, %v454
        %v463 = vpack.c.b16 %v455, %v455
        %v464 = vpack.c.b16 %v456, %v456
        %v465 = vpack.c.b16 %v457, %v457
        %466 = vrot.lane.b32.xlu0 %v458, 64
        %v467 = vpop.permute.xlu0 %466
        %468 = vrot.lane.b32.xlu0 %v459, 64
        %v469 = vpop.permute.xlu0 %468
        %470 = vrot.lane.b32.xlu0 %v460, 64
        %v471 = vpop.permute.xlu0 %470
        %472 = vrot.lane.b32.xlu0 %v461, 64
        %v473 = vpop.permute.xlu0 %472
        %474 = vrot.lane.b32.xlu0 %v462, 64
        %v475 = vpop.permute.xlu0 %474
        %476 = vrot.lane.b32.xlu0 %v463, 64
        %v477 = vpop.permute.xlu0 %476
        %478 = vrot.lane.b32.xlu0 %v464, 64
        %v479 = vpop.permute.xlu0 %478
        %480 = vrot.lane.b32.xlu0 %v465, 64
        %v481 = vpop.permute.xlu0 %480
        %v483 = vshrl.u32 %v458, 16
        %v485 = vshll.u32 %v458, 16
        %v487 = vrot.slane %v485, 1
        %v488 = vor.u32 %v483, %v487
        %v490 = vshrl.u32 %v459, 16
        %v492 = vshll.u32 %v459, 16
        %v494 = vrot.slane %v492, 1
        %v495 = vor.u32 %v490, %v494
        %v497 = vshrl.u32 %v460, 16
        %v499 = vshll.u32 %v460, 16
        %v501 = vrot.slane %v499, 1
        %v502 = vor.u32 %v497, %v501
        %v504 = vshrl.u32 %v461, 16
        %v506 = vshll.u32 %v461, 16
        %v508 = vrot.slane %v506, 1
        %v509 = vor.u32 %v504, %v508
        %v511 = vshrl.u32 %v462, 16
        %v513 = vshll.u32 %v462, 16
        %v515 = vrot.slane %v513, 1
        %v516 = vor.u32 %v511, %v515
        %v518 = vshrl.u32 %v463, 16
        %v520 = vshll.u32 %v463, 16
        %v522 = vrot.slane %v520, 1
        %v523 = vor.u32 %v518, %v522
        %v525 = vshrl.u32 %v464, 16
        %v527 = vshll.u32 %v464, 16
        %v529 = vrot.slane %v527, 1
        %v530 = vor.u32 %v525, %v529
        %v532 = vshrl.u32 %v465, 16
        %v534 = vshll.u32 %v465, 16
        %v536 = vrot.slane %v534, 1
        %v537 = vor.u32 %v532, %v536
        %v554 = vunpack.c.l.b16 %v254
        %v555 = vunpack.c.l.b16 %v255
        %v556 = vunpack.c.l.b16 %v256
        %v557 = vunpack.c.l.b16 %v257
        %v558 = vunpack.c.l.b16 %v258
        %v559 = vunpack.c.l.b16 %v259
        %v560 = vunpack.c.l.b16 %v260
        %v561 = vunpack.c.l.b16 %v261
        %v562 = vunpack.c.l.b16 %v262
        %v563 = vunpack.c.l.b16 %v263
        %v564 = vunpack.c.l.b16 %v264
        %v565 = vunpack.c.l.b16 %v265
        %v566 = vunpack.c.l.b16 %v266
        %v567 = vunpack.c.l.b16 %v267
        %v568 = vunpack.c.l.b16 %v268
        %v569 = vunpack.c.l.b16 %v269
        %v570 = vpack.c.b16 %v555, %v554
        %v571 = vpack.c.b16 %v557, %v556
        %v572 = vpack.c.b16 %v559, %v558
        %v573 = vpack.c.b16 %v561, %v560
        %v574 = vpack.c.b16 %v563, %v562
        %v575 = vpack.c.b16 %v565, %v564
        %v576 = vpack.c.b16 %v567, %v566
        %v577 = vpack.c.b16 %v569, %v568
        %v578 = vrot.slane %v570, 1
        %v579 = vrot.slane %v571, 1
        %v580 = vrot.slane %v572, 1
        %v581 = vrot.slane %v573, 1
        %v582 = vrot.slane %v574, 1
        %v583 = vrot.slane %v575, 1
        %v584 = vrot.slane %v576, 1
        %v585 = vrot.slane %v577, 1
        %586 = vrot.lane.b32.xlu0 %v578, 64
        %v587 = vpop.permute.xlu0 %586
        %588 = vrot.lane.b32.xlu0 %v579, 64
        %v589 = vpop.permute.xlu0 %588
        %590 = vrot.lane.b32.xlu0 %v580, 64
        %v591 = vpop.permute.xlu0 %590
        %592 = vrot.lane.b32.xlu0 %v581, 64
        %v593 = vpop.permute.xlu0 %592
        %594 = vrot.lane.b32.xlu0 %v582, 64
        %v595 = vpop.permute.xlu0 %594
        %596 = vrot.lane.b32.xlu0 %v583, 64
        %v597 = vpop.permute.xlu0 %596
        %598 = vrot.lane.b32.xlu0 %v584, 64
        %v599 = vpop.permute.xlu0 %598
        %600 = vrot.lane.b32.xlu0 %v585, 64
        %v601 = vpop.permute.xlu0 %600
        %v610 = vunpack.c.l.b16 %v274
        %v611 = vunpack.c.l.b16 %v275
        %v612 = vunpack.c.l.b16 %v276
        %v613 = vunpack.c.l.b16 %v277
        %v614 = vunpack.c.l.b16 %v278
        %v615 = vunpack.c.l.b16 %v279
        %v616 = vunpack.c.l.b16 %v280
        %v617 = vunpack.c.l.b16 %v281
        %v618 = vpack.c.b16 %v610, %v610
        %v619 = vpack.c.b16 %v611, %v611
        %v620 = vpack.c.b16 %v612, %v612
        %v621 = vpack.c.b16 %v613, %v613
        %v622 = vpack.c.b16 %v614, %v614
        %v623 = vpack.c.b16 %v615, %v615
        %v624 = vpack.c.b16 %v616, %v616
        %v625 = vpack.c.b16 %v617, %v617
        %v627 = vshrl.u32 %v618, 16
        %v629 = vshll.u32 %v618, 16
        %v631 = vrot.slane %v629, 1
        %v632 = vor.u32 %v627, %v631
        %v634 = vshrl.u32 %v619, 16
        %v636 = vshll.u32 %v619, 16
        %v638 = vrot.slane %v636, 1
        %v639 = vor.u32 %v634, %v638
        %v641 = vshrl.u32 %v620, 16
        %v643 = vshll.u32 %v620, 16
        %v645 = vrot.slane %v643, 1
        %v646 = vor.u32 %v641, %v645
        %v648 = vshrl.u32 %v621, 16
        %v650 = vshll.u32 %v621, 16
        %v652 = vrot.slane %v650, 1
        %v653 = vor.u32 %v648, %v652
        %v655 = vshrl.u32 %v622, 16
        %v657 = vshll.u32 %v622, 16
        %v659 = vrot.slane %v657, 1
        %v660 = vor.u32 %v655, %v659
        %v662 = vshrl.u32 %v623, 16
        %v664 = vshll.u32 %v623, 16
        %v666 = vrot.slane %v664, 1
        %v667 = vor.u32 %v662, %v666
        %v669 = vshrl.u32 %v624, 16
        %v671 = vshll.u32 %v624, 16
        %v673 = vrot.slane %v671, 1
        %v674 = vor.u32 %v669, %v673
        %v676 = vshrl.u32 %v625, 16
        %v678 = vshll.u32 %v625, 16
        %v680 = vrot.slane %v678, 1
        %v681 = vor.u32 %v676, %v680
        %682 = vrot.lane.b32.xlu0 %v632, 64
        %v683 = vpop.permute.xlu0 %682
        %684 = vrot.lane.b32.xlu0 %v639, 64
        %v685 = vpop.permute.xlu0 %684
        %686 = vrot.lane.b32.xlu0 %v646, 64
        %v687 = vpop.permute.xlu0 %686
        %688 = vrot.lane.b32.xlu0 %v653, 64
        %v689 = vpop.permute.xlu0 %688
        %690 = vrot.lane.b32.xlu0 %v660, 64
        %v691 = vpop.permute.xlu0 %690
        %692 = vrot.lane.b32.xlu0 %v667, 64
        %v693 = vpop.permute.xlu0 %692
        %694 = vrot.lane.b32.xlu0 %v674, 64
        %v695 = vpop.permute.xlu0 %694
        %696 = vrot.lane.b32.xlu0 %v681, 64
        %v697 = vpop.permute.xlu0 %696
        %v714 = vunpack.c.l.b16 %v282
        %v715 = vunpack.c.l.b16 %v283
        %v716 = vunpack.c.l.b16 %v284
        %v717 = vunpack.c.l.b16 %v285
        %v718 = vunpack.c.l.b16 %v286
        %v719 = vunpack.c.l.b16 %v287
        %v720 = vunpack.c.l.b16 %v288
        %v721 = vunpack.c.l.b16 %v289
        %v722 = vunpack.c.l.b16 %v290
        %v723 = vunpack.c.l.b16 %v291
        %v724 = vunpack.c.l.b16 %v292
        %v725 = vunpack.c.l.b16 %v293
        %v726 = vunpack.c.l.b16 %v294
        %v727 = vunpack.c.l.b16 %v295
        %v728 = vunpack.c.l.b16 %v296
        %v729 = vunpack.c.l.b16 %v297
        %v730 = vpack.c.b16 %v715, %v714
        %v731 = vpack.c.b16 %v717, %v716
        %v732 = vpack.c.b16 %v719, %v718
        %v733 = vpack.c.b16 %v721, %v720
        %v734 = vpack.c.b16 %v723, %v722
        %v735 = vpack.c.b16 %v725, %v724
        %v736 = vpack.c.b16 %v727, %v726
        %v737 = vpack.c.b16 %v729, %v728
        %v738 = vrot.slane %v730, 1
        %v739 = vrot.slane %v731, 1
        %v740 = vrot.slane %v732, 1
        %v741 = vrot.slane %v733, 1
        %v742 = vrot.slane %v734, 1
        %v743 = vrot.slane %v735, 1
        %v744 = vrot.slane %v736, 1
        %v745 = vrot.slane %v737, 1
        %vm746 = vcmask 523264
        %v749 = vsel %vm746, %v218, %v379
        %v752 = vsel %vm746, %v219, %v381
        %v755 = vsel %vm746, %v220, %v383
        %v758 = vsel %vm746, %v221, %v385
        %v761 = vsel %vm746, %v222, %v387
        %v764 = vsel %vm746, %v223, %v389
        %v767 = vsel %vm746, %v224, %v391
        %v770 = vsel %vm746, %v225, %v393
        %v773 = vsel %vm746, %v434, %v467
        %v776 = vsel %vm746, %v435, %v469
        %v779 = vsel %vm746, %v436, %v471
        %v782 = vsel %vm746, %v437, %v473
        %v785 = vsel %vm746, %v438, %v475
        %v788 = vsel %vm746, %v439, %v477
        %v791 = vsel %vm746, %v440, %v479
        %v794 = vsel %vm746, %v441, %v481
        %v797 = vsel %vm746, %v488, %v587
        %v800 = vsel %vm746, %v495, %v589
        %v803 = vsel %vm746, %v502, %v591
        %v806 = vsel %vm746, %v509, %v593
        %v809 = vsel %vm746, %v516, %v595
        %v812 = vsel %vm746, %v523, %v597
        %v815 = vsel %vm746, %v530, %v599
        %v818 = vsel %vm746, %v537, %v601
        %v821 = vsel %vm746, %v274, %v683
        %v824 = vsel %vm746, %v275, %v685
        %v827 = vsel %vm746, %v276, %v687
        %v830 = vsel %vm746, %v277, %v689
        %v833 = vsel %vm746, %v278, %v691
        %v836 = vsel %vm746, %v279, %v693
        %v839 = vsel %vm746, %v280, %v695
        %v842 = vsel %vm746, %v281, %v697
        %v867 = vrot.slane %v773, 7
        %v868 = vrot.slane %v797, 6
        %v869 = vrot.slane %v821, 5
        %v870 = vrot.slane %v738, 4
        %v871 = vrot.slane %v776, 7
        %v872 = vrot.slane %v800, 6
        %v873 = vrot.slane %v824, 5
        %v874 = vrot.slane %v739, 4
        %v875 = vrot.slane %v779, 7
        %v876 = vrot.slane %v803, 6
        %v877 = vrot.slane %v827, 5
        %v878 = vrot.slane %v740, 4
        %v879 = vrot.slane %v782, 7
        %v880 = vrot.slane %v806, 6
        %v881 = vrot.slane %v830, 5
        %v882 = vrot.slane %v741, 4
        %v883 = vrot.slane %v785, 7
        %v884 = vrot.slane %v809, 6
        %v885 = vrot.slane %v833, 5
        %v886 = vrot.slane %v742, 4
        %v887 = vrot.slane %v788, 7
        %v888 = vrot.slane %v812, 6
        %v889 = vrot.slane %v836, 5
        %v890 = vrot.slane %v743, 4
        %v891 = vrot.slane %v791, 7
        %v892 = vrot.slane %v815, 6
        %v893 = vrot.slane %v839, 5
        %v894 = vrot.slane %v744, 4
        %v895 = vrot.slane %v794, 7
        %v896 = vrot.slane %v818, 6
        %v897 = vrot.slane %v842, 5
        %v898 = vrot.slane %v745, 4
        %vm899 = vcmask 1040384
        %v901 = vsel %vm899, %v749, %v867
        %vm902 = vcmask 1041408
        %v904 = vsel %vm902, %v901, %v868
        %vm905 = vcmask 1043459
        %v908 = vsel %vm905, %v869, %v870
        %vm909 = vcmask 1042432
        %v910 = vsel %vm909, %v904, %v908
        %vm912 = vcmask 1041409
        %v913 = vsel %vm912, %v749, %v867
        %vm914 = vcmask 1042433
        %v915 = vsel %vm914, %v913, %v868
        %vm916 = vcmask 1044484
        %v917 = vsel %vm916, %v869, %v870
        %vm918 = vcmask 1043457
        %v919 = vsel %vm918, %v915, %v917
        %v921 = vrot.slane %v919, 1
        %vm922 = vcmask 1042434
        %v923 = vsel %vm922, %v749, %v867
        %vm924 = vcmask 1043458
        %v925 = vsel %vm924, %v923, %v868
        %vm926 = vcmask 1045509
        %v927 = vsel %vm926, %v869, %v870
        %vm928 = vcmask 1044482
        %v929 = vsel %vm928, %v925, %v927
        %v931 = vrot.slane %v929, 2
        %v932 = vsel %vm905, %v749, %v867
        %vm933 = vcmask 1044483
        %v934 = vsel %vm933, %v932, %v868
        %vm935 = vcmask 1046534
        %v936 = vsel %vm935, %v869, %v870
        %vm937 = vcmask 1045507
        %v938 = vsel %vm937, %v934, %v936
        %v940 = vrot.slane %v938, 3
        %v942 = vsel %vm899, %v752, %v871
        %v944 = vsel %vm902, %v942, %v872
        %v947 = vsel %vm905, %v873, %v874
        %v948 = vsel %vm909, %v944, %v947
        %v950 = vsel %vm912, %v752, %v871
        %v951 = vsel %vm914, %v950, %v872
        %v952 = vsel %vm916, %v873, %v874
        %v953 = vsel %vm918, %v951, %v952
        %v955 = vrot.slane %v953, 1
        %v956 = vsel %vm922, %v752, %v871
        %v957 = vsel %vm924, %v956, %v872
        %v958 = vsel %vm926, %v873, %v874
        %v959 = vsel %vm928, %v957, %v958
        %v961 = vrot.slane %v959, 2
        %v962 = vsel %vm905, %v752, %v871
        %v963 = vsel %vm933, %v962, %v872
        %v964 = vsel %vm935, %v873, %v874
        %v965 = vsel %vm937, %v963, %v964
        %v967 = vrot.slane %v965, 3
        %v969 = vsel %vm899, %v755, %v875
        %v971 = vsel %vm902, %v969, %v876
        %v974 = vsel %vm905, %v877, %v878
        %v975 = vsel %vm909, %v971, %v974
        %v977 = vsel %vm912, %v755, %v875
        %v978 = vsel %vm914, %v977, %v876
        %v979 = vsel %vm916, %v877, %v878
        %v980 = vsel %vm918, %v978, %v979
        %v982 = vrot.slane %v980, 1
        %v983 = vsel %vm922, %v755, %v875
        %v984 = vsel %vm924, %v983, %v876
        %v985 = vsel %vm926, %v877, %v878
        %v986 = vsel %vm928, %v984, %v985
        %v988 = vrot.slane %v986, 2
        %v989 = vsel %vm905, %v755, %v875
        %v990 = vsel %vm933, %v989, %v876
        %v991 = vsel %vm935, %v877, %v878
        %v992 = vsel %vm937, %v990, %v991
        %v994 = vrot.slane %v992, 3
        %v996 = vsel %vm899, %v758, %v879
        %v998 = vsel %vm902, %v996, %v880
        %v1001 = vsel %vm905, %v881, %v882
        %v1002 = vsel %vm909, %v998, %v1001
        %v1004 = vsel %vm912, %v758, %v879
        %v1005 = vsel %vm914, %v1004, %v880
        %v1006 = vsel %vm916, %v881, %v882
        %v1007 = vsel %vm918, %v1005, %v1006
        %v1009 = vrot.slane %v1007, 1
        %v1010 = vsel %vm922, %v758, %v879
        %v1011 = vsel %vm924, %v1010, %v880
        %v1012 = vsel %vm926, %v881, %v882
        %v1013 = vsel %vm928, %v1011, %v1012
        %v1015 = vrot.slane %v1013, 2
        %v1016 = vsel %vm905, %v758, %v879
        %v1017 = vsel %vm933, %v1016, %v880
        %v1018 = vsel %vm935, %v881, %v882
        %v1019 = vsel %vm937, %v1017, %v1018
        %v1021 = vrot.slane %v1019, 3
        %v1023 = vsel %vm899, %v761, %v883
        %v1025 = vsel %vm902, %v1023, %v884
        %v1028 = vsel %vm905, %v885, %v886
        %v1029 = vsel %vm909, %v1025, %v1028
        %v1031 = vsel %vm912, %v761, %v883
        %v1032 = vsel %vm914, %v1031, %v884
        %v1033 = vsel %vm916, %v885, %v886
        %v1034 = vsel %vm918, %v1032, %v1033
        %v1036 = vrot.slane %v1034, 1
        %v1037 = vsel %vm922, %v761, %v883
        %v1038 = vsel %vm924, %v1037, %v884
        %v1039 = vsel %vm926, %v885, %v886
        %v1040 = vsel %vm928, %v1038, %v1039
        %v1042 = vrot.slane %v1040, 2
        %v1043 = vsel %vm905, %v761, %v883
        %v1044 = vsel %vm933, %v1043, %v884
        %v1045 = vsel %vm935, %v885, %v886
        %v1046 = vsel %vm937, %v1044, %v1045
        %v1048 = vrot.slane %v1046, 3
        %v1050 = vsel %vm899, %v764, %v887
        %v1052 = vsel %vm902, %v1050, %v888
        %v1055 = vsel %vm905, %v889, %v890
        %v1056 = vsel %vm909, %v1052, %v1055
        %v1058 = vsel %vm912, %v764, %v887
        %v1059 = vsel %vm914, %v1058, %v888
        %v1060 = vsel %vm916, %v889, %v890
        %v1061 = vsel %vm918, %v1059, %v1060
        %v1063 = vrot.slane %v1061, 1
        %v1064 = vsel %vm922, %v764, %v887
        %v1065 = vsel %vm924, %v1064, %v888
        %v1066 = vsel %vm926, %v889, %v890
        %v1067 = vsel %vm928, %v1065, %v1066
        %v1069 = vrot.slane %v1067, 2
        %v1070 = vsel %vm905, %v764, %v887
        %v1071 = vsel %vm933, %v1070, %v888
        %v1072 = vsel %vm935, %v889, %v890
        %v1073 = vsel %vm937, %v1071, %v1072
        %v1075 = vrot.slane %v1073, 3
        %v1077 = vsel %vm899, %v767, %v891
        %v1079 = vsel %vm902, %v1077, %v892
        %v1082 = vsel %vm905, %v893, %v894
        %v1083 = vsel %vm909, %v1079, %v1082
        %v1085 = vsel %vm912, %v767, %v891
        %v1086 = vsel %vm914, %v1085, %v892
        %v1087 = vsel %vm916, %v893, %v894
        %v1088 = vsel %vm918, %v1086, %v1087
        %v1090 = vrot.slane %v1088, 1
        %v1091 = vsel %vm922, %v767, %v891
        %v1092 = vsel %vm924, %v1091, %v892
        %v1093 = vsel %vm926, %v893, %v894
        %v1094 = vsel %vm928, %v1092, %v1093
        %v1096 = vrot.slane %v1094, 2
        %v1097 = vsel %vm905, %v767, %v891
        %v1098 = vsel %vm933, %v1097, %v892
        %v1099 = vsel %vm935, %v893, %v894
        %v1100 = vsel %vm937, %v1098, %v1099
        %v1102 = vrot.slane %v1100, 3
        %v1104 = vsel %vm899, %v770, %v895
        %v1106 = vsel %vm902, %v1104, %v896
        %v1109 = vsel %vm905, %v897, %v898
        %v1110 = vsel %vm909, %v1106, %v1109
        %v1112 = vsel %vm912, %v770, %v895
        %v1113 = vsel %vm914, %v1112, %v896
        %v1114 = vsel %vm916, %v897, %v898
        %v1115 = vsel %vm918, %v1113, %v1114
        %v1117 = vrot.slane %v1115, 1
        %v1118 = vsel %vm922, %v770, %v895
        %v1119 = vsel %vm924, %v1118, %v896
        %v1120 = vsel %vm926, %v897, %v898
        %v1121 = vsel %vm928, %v1119, %v1120
        %v1123 = vrot.slane %v1121, 2
        %v1124 = vsel %vm905, %v770, %v895
        %v1125 = vsel %vm933, %v1124, %v896
        %v1126 = vsel %vm935, %v897, %v898
        %v1127 = vsel %vm937, %v1125, %v1126
        %v1129 = vrot.slane %v1127, 3
        %v1130 = vunpack.i.l.s16 %v910
        %v1131 = vunpack.i.h.s16 %v910
        %v1132 = vunpack.i.l.s16 %v921
        %v1133 = vunpack.i.h.s16 %v921
        %v1134 = vunpack.i.l.s16 %v931
        %v1135 = vunpack.i.h.s16 %v931
        %v1136 = vunpack.i.l.s16 %v940
        %v1137 = vunpack.i.l.s16 %v948
        %v1138 = vunpack.i.h.s16 %v948
        %v1139 = vunpack.i.l.s16 %v955
        %v1140 = vunpack.i.h.s16 %v955
        %v1141 = vunpack.i.l.s16 %v961
        %v1142 = vunpack.i.h.s16 %v961
        %v1143 = vunpack.i.l.s16 %v967
        %v1144 = vunpack.i.l.s16 %v975
        %v1145 = vunpack.i.h.s16 %v975
        %v1146 = vunpack.i.l.s16 %v982
        %v1147 = vunpack.i.h.s16 %v982
        %v1148 = vunpack.i.l.s16 %v988
        %v1149 = vunpack.i.h.s16 %v988
        %v1150 = vunpack.i.l.s16 %v994
        %v1151 = vunpack.i.l.s16 %v1002
        %v1152 = vunpack.i.h.s16 %v1002
        %v1153 = vunpack.i.l.s16 %v1009
        %v1154 = vunpack.i.h.s16 %v1009
        %v1155 = vunpack.i.l.s16 %v1015
        %v1156 = vunpack.i.h.s16 %v1015
        %v1157 = vunpack.i.l.s16 %v1021
        %v1158 = vunpack.i.l.s16 %v1029
        %v1159 = vunpack.i.h.s16 %v1029
        %v1160 = vunpack.i.l.s16 %v1036
        %v1161 = vunpack.i.h.s16 %v1036
        %v1162 = vunpack.i.l.s16 %v1042
        %v1163 = vunpack.i.h.s16 %v1042
        %v1164 = vunpack.i.l.s16 %v1048
        %v1165 = vunpack.i.l.s16 %v1056
        %v1166 = vunpack.i.h.s16 %v1056
        %v1167 = vunpack.i.l.s16 %v1063
        %v1168 = vunpack.i.h.s16 %v1063
        %v1169 = vunpack.i.l.s16 %v1069
        %v1170 = vunpack.i.h.s16 %v1069
        %v1171 = vunpack.i.l.s16 %v1075
        %v1172 = vunpack.i.l.s16 %v1083
        %v1173 = vunpack.i.h.s16 %v1083
        %v1174 = vunpack.i.l.s16 %v1090
        %v1175 = vunpack.i.h.s16 %v1090
        %v1176 = vunpack.i.l.s16 %v1096
        %v1177 = vunpack.i.h.s16 %v1096
        %v1178 = vunpack.i.l.s16 %v1102
        %v1179 = vunpack.i.l.s16 %v1110
        %v1180 = vunpack.i.h.s16 %v1110
        %v1181 = vunpack.i.l.s16 %v1117
        %v1182 = vunpack.i.h.s16 %v1117
        %v1183 = vunpack.i.l.s16 %v1123
        %v1184 = vunpack.i.h.s16 %v1123
        %v1185 = vunpack.i.l.s16 %v1129
        %v1186 = vld [vmem:[#allocation2] sm:$0xff]
        %v1187 = vld [vmem:[#allocation2 + $0x8] sm:$0xff]
        %v1188 = vld [vmem:[#allocation2 + $0x10] sm:$0xff]
        %v1189 = vld [vmem:[#allocation2 + $0x18] sm:$0xff]
        %v1190 = vld [vmem:[#allocation2 + $0x20] sm:$0xff]
        %v1191 = vld [vmem:[#allocation2 + $0x28] sm:$0xff]
        %v1192 = vld [vmem:[#allocation2 + $0x30] sm:$0xff]
        %v1193 = vld [vmem:[#allocation2 + $0x38] sm:$0xff]
        %v1194 = vld [vmem:[#allocation2 + $0x40] sm:$0xff]
        %v1195 = vld [vmem:[#allocation2 + $0x48] sm:$0xff]
        %v1196 = vld [vmem:[#allocation2 + $0x50] sm:$0xff]
        %v1197 = vld [vmem:[#allocation2 + $0x58] sm:$0xff]
        %v1198 = vld [vmem:[#allocation2 + $0x60] sm:$0xff]
        %v1199 = vld [vmem:[#allocation2 + $0x68] sm:$0xff]
        %v1200 = vld [vmem:[#allocation2 + $0x70] sm:$0xff]
        %v1201 = vld [vmem:[#allocation2 + $0x78] sm:$0xff]
        %v1202 = vld [vmem:[#allocation2 + $0x80] sm:$0xff]
        %v1203 = vld [vmem:[#allocation2 + $0x88] sm:$0xff]
        %v1204 = vld [vmem:[#allocation2 + $0x90] sm:$0xff]
        %v1205 = vld [vmem:[#allocation2 + $0x98] sm:$0xff]
        %v1206 = vld [vmem:[#allocation2 + $0xa0] sm:$0xff]
        %v1207 = vld [vmem:[#allocation2 + $0xa8] sm:$0xff]
        %v1208 = vld [vmem:[#allocation2 + $0xb0] sm:$0xff]
        %v1209 = vld [vmem:[#allocation2 + $0xb8] sm:$0xff]
        %v1210 = vld [vmem:[#allocation2 + $0xc0] sm:$0xff]
        %v1211 = vld [vmem:[#allocation2 + $0xc8] sm:$0xff]
        %v1212 = vld [vmem:[#allocation2 + $0xd0] sm:$0xff]
        %v1213 = vld [vmem:[#allocation2 + $0xd8] sm:$0xff]
        %v1214 = vld [vmem:[#allocation2 + $0xe0] sm:$0xff]
        %v1215 = vld [vmem:[#allocation2 + $0xe8] sm:$0xff]
        %v1216 = vld [vmem:[#allocation2 + $0xf0] sm:$0xff]
        %v1217 = vld [vmem:[#allocation2 + $0xf8] sm:$0xff]
        %v1218 = vld [vmem:[#allocation2 + $0x100] sm:$0xff]
        %v1219 = vld [vmem:[#allocation2 + $0x108] sm:$0xff]
        %v1220 = vld [vmem:[#allocation2 + $0x110] sm:$0xff]
        %v1221 = vld [vmem:[#allocation2 + $0x118] sm:$0xff]
        %v1222 = vld [vmem:[#allocation2 + $0x120] sm:$0xff]
        %v1223 = vld [vmem:[#allocation2 + $0x128] sm:$0xff]
        %v1224 = vld [vmem:[#allocation2 + $0x130] sm:$0xff]
        %v1225 = vld [vmem:[#allocation2 + $0x138] sm:$0xff]
        %v1226 = vld [vmem:[#allocation2 + $0x140] sm:$0xff]
        %v1227 = vld [vmem:[#allocation2 + $0x148] sm:$0xff]
        %v1228 = vld [vmem:[#allocation2 + $0x150] sm:$0xff]
        %v1229 = vld [vmem:[#allocation2 + $0x158] sm:$0xff]
        %v1230 = vld [vmem:[#allocation2 + $0x160] sm:$0xff]
        %v1231 = vld [vmem:[#allocation2 + $0x168] sm:$0xff]
        %v1232 = vld [vmem:[#allocation2 + $0x170] sm:$0xff]
        %v1233 = vld [vmem:[#allocation2 + $0x178] sm:$0xff]
        %v1234 = vld [vmem:[#allocation2 + $0x180] sm:$0xff]
        %v1235 = vld [vmem:[#allocation2 + $0x188] sm:$0xff]
        %v1236 = vld [vmem:[#allocation2 + $0x190] sm:$0xff]
        %v1237 = vld [vmem:[#allocation2 + $0x198] sm:$0xff]
        %v1238 = vld [vmem:[#allocation2 + $0x1a0] sm:$0xff]
        %v1239 = vld [vmem:[#allocation2 + $0x1a8] sm:$0xff]
        %v1240 = vld [vmem:[#allocation2 + $0x1b0] sm:$0xff]
        %v1241 = vld [vmem:[#allocation2 + $0x1b8] sm:$0xff]
        %v1242 = vld [vmem:[#allocation2 + $0x1c0] sm:$0xff]
        %v1243 = vld [vmem:[#allocation2 + $0x1c8] sm:$0xff]
        %v1244 = vld [vmem:[#allocation2 + $0x1d0] sm:$0xff]
        %v1245 = vld [vmem:[#allocation2 + $0x1d8] sm:$0xff]
        %v1246 = vld [vmem:[#allocation2 + $0x1e0] sm:$0xff]
        %v1247 = vld [vmem:[#allocation2 + $0x1e8] sm:$0xff]
        %v1248 = vld [vmem:[#allocation2 + $0x1f0] sm:$0xff]
        %v1249 = vld [vmem:[#allocation2 + $0x1f8] sm:$0xff]
        %v1250 = vld [vmem:[#allocation2 + $0x200] sm:$0xff]
        %v1251 = vld [vmem:[#allocation2 + $0x208] sm:$0xff]
        %v1252 = vld [vmem:[#allocation2 + $0x210] sm:$0xff]
        %v1253 = vld [vmem:[#allocation2 + $0x218] sm:$0xff]
        %v1254 = vld [vmem:[#allocation2 + $0x220] sm:$0xff]
        %v1255 = vld [vmem:[#allocation2 + $0x228] sm:$0xff]
        %v1256 = vld [vmem:[#allocation2 + $0x230] sm:$0xff]
        %v1257 = vld [vmem:[#allocation2 + $0x238] sm:$0xff]
        %v1258 = vld [vmem:[%s2] sm:$0x3]
        %v1260 = vperm.slane %v1258, 0
        %v1261 = vperm.slane %v1258, 1
        %v1264 = vpack.i.b16 %v1131, %v1130
        %v1265 = vpack.i.b16 %v1133, %v1132
        %v1266 = vpack.i.b16 %v1135, %v1134
        %v1267 = vpack.i.b16 %v1137, %v1136
        %v1268 = vpack.i.b16 %v1139, %v1138
        %v1269 = vpack.i.b16 %v1141, %v1140
        %v1270 = vpack.i.b16 %v1143, %v1142
        %v1271 = vpack.i.b16 %v1145, %v1144
        %v1272 = vpack.i.b16 %v1147, %v1146
        %v1273 = vpack.i.b16 %v1149, %v1148
        %v1274 = vpack.i.b16 %v1151, %v1150
        %v1275 = vpack.i.b16 %v1153, %v1152
        %v1276 = vpack.i.b16 %v1155, %v1154
        %v1277 = vpack.i.b16 %v1157, %v1156
        %v1278 = vpack.i.b16 %v1159, %v1158
        %v1279 = vpack.i.b16 %v1161, %v1160
        %v1280 = vpack.i.b16 %v1163, %v1162
        %v1281 = vpack.i.b16 %v1165, %v1164
        %v1282 = vpack.i.b16 %v1167, %v1166
        %v1283 = vpack.i.b16 %v1169, %v1168
        %v1284 = vpack.i.b16 %v1171, %v1170
        %v1285 = vpack.i.b16 %v1173, %v1172
        %v1286 = vpack.i.b16 %v1175, %v1174
        %v1287 = vpack.i.b16 %v1177, %v1176
        %v1288 = vpack.i.b16 %v1179, %v1178
        %v1289 = vpack.i.b16 %v1181, %v1180
        %v1290 = vpack.i.b16 %v1183, %v1182
        %v1291 = vpack.i.b16 %v1185, %v1184
        %1293 = vst [vmem:[#allocation1] ss:$9 sm:$0xff] %v1264
        %s1295 = scalar_lea.vmem [#allocation1], 1
        %1296 = vst [vmem:[%s1295] ss:$9 sm:$0xff] %v1265
        %s1298 = scalar_lea.vmem [#allocation1], 2
        %1299 = vst [vmem:[%s1298] ss:$9 sm:$0xff] %v1266
        %s1301 = scalar_lea.vmem [#allocation1], 3
        %1302 = vst [vmem:[%s1301] ss:$9 sm:$0xff] %v1267
        %s1304 = scalar_lea.vmem [#allocation1], 4
        %1305 = vst [vmem:[%s1304] ss:$9 sm:$0xff] %v1268
        %s1307 = scalar_lea.vmem [#allocation1], 5
        %1308 = vst [vmem:[%s1307] ss:$9 sm:$0xff] %v1269
        %s1310 = scalar_lea.vmem [#allocation1], 6
        %1311 = vst [vmem:[%s1310] ss:$9 sm:$0xff] %v1270
        %s1313 = scalar_lea.vmem [#allocation1], 7
        %1314 = vst [vmem:[%s1313] ss:$9 sm:$0xff] %v1271
        %v1315 = vld [vmem:[#allocation1] sm:$0xff]
        %v1316 = vld [vmem:[#allocation1 + $0x9] sm:$0xff]
        %v1317 = vld [vmem:[#allocation1 + $0x12] sm:$0xff]
        %v1318 = vld [vmem:[#allocation1 + $0x1b] sm:$0xff]
        %v1319 = vld [vmem:[#allocation1 + $0x24] sm:$0xff]
        %1321 = vst [vmem:[#allocation1] ss:$9 sm:$0xff] %v1272
        %1323 = vst [vmem:[%s1295] ss:$9 sm:$0xff] %v1273
        %1325 = vst [vmem:[%s1298] ss:$9 sm:$0xff] %v1274
        %1327 = vst [vmem:[%s1301] ss:$9 sm:$0xff] %v1275
        %1329 = vst [vmem:[%s1304] ss:$9 sm:$0xff] %v1276
        %1331 = vst [vmem:[%s1307] ss:$9 sm:$0xff] %v1277
        %1333 = vst [vmem:[%s1310] ss:$9 sm:$0xff] %v1278
        %1335 = vst [vmem:[%s1313] ss:$9 sm:$0xff] %v1279
        %v1336 = vld [vmem:[#allocation1] sm:$0xff]
        %v1337 = vld [vmem:[#allocation1 + $0x9] sm:$0xff]
        %v1338 = vld [vmem:[#allocation1 + $0x12] sm:$0xff]
        %v1339 = vld [vmem:[#allocation1 + $0x1b] sm:$0xff]
        %v1340 = vld [vmem:[#allocation1 + $0x24] sm:$0xff]
        %1342 = vst [vmem:[#allocation1] ss:$9 sm:$0xff] %v1280
        %1344 = vst [vmem:[%s1295] ss:$9 sm:$0xff] %v1281
        %1346 = vst [vmem:[%s1298] ss:$9 sm:$0xff] %v1282
        %1348 = vst [vmem:[%s1301] ss:$9 sm:$0xff] %v1283
        %1350 = vst [vmem:[%s1304] ss:$9 sm:$0xff] %v1284
        %1352 = vst [vmem:[%s1307] ss:$9 sm:$0xff] %v1285
        %1354 = vst [vmem:[%s1310] ss:$9 sm:$0xff] %v1286
        %1356 = vst [vmem:[%s1313] ss:$9 sm:$0xff] %v1287
        %v1357 = vld [vmem:[#allocation1] sm:$0xff]
        %v1358 = vld [vmem:[#allocation1 + $0x9] sm:$0xff]
        %v1359 = vld [vmem:[#allocation1 + $0x12] sm:$0xff]
        %v1360 = vld [vmem:[#allocation1 + $0x1b] sm:$0xff]
        %v1361 = vld [vmem:[#allocation1 + $0x24] sm:$0xff]
        %1363 = vst [vmem:[#allocation1] ss:$9 sm:$0xff] %v1288
        %1365 = vst [vmem:[%s1295] ss:$9 sm:$0xff] %v1289
        %1367 = vst [vmem:[%s1298] ss:$9 sm:$0xff] %v1290
        %1369 = vst [vmem:[%s1301] ss:$9 sm:$0xff] %v1291
        %v1370 = vld [vmem:[#allocation1] sm:$0xff]
        %v1371 = vld [vmem:[#allocation1 + $0x9] sm:$0xff]
        %v1372 = vld [vmem:[#allocation1 + $0x12] sm:$0xff]
        %v1373 = vld [vmem:[#allocation1 + $0x1b] sm:$0xff]
        %v1374 = vld [vmem:[#allocation1 + $0x24] sm:$0xff]
        %v1463 = vunpack.c.l.b16 %v1186
        %v1464 = vunpack.c.h.b16 %v1186
        %v1465 = vunpack.c.l.b16 %v1187
        %v1466 = vunpack.c.h.b16 %v1187
        %v1467 = vunpack.c.l.b16 %v1188
        %v1468 = vunpack.c.h.b16 %v1188
        %v1469 = vunpack.c.l.b16 %v1189
        %v1470 = vunpack.c.h.b16 %v1189
        %v1471 = vunpack.c.l.b16 %v1190
        %v1472 = vunpack.c.h.b16 %v1190
        %v1473 = vunpack.c.l.b16 %v1191
        %v1474 = vunpack.c.h.b16 %v1191
        %v1475 = vunpack.c.l.b16 %v1192
        %v1476 = vunpack.c.h.b16 %v1192
        %v1477 = vunpack.c.l.b16 %v1193
        %v1478 = vunpack.c.h.b16 %v1193
        %v1479 = vunpack.c.l.b16 %v1194
        %v1480 = vunpack.c.h.b16 %v1194
        %v1481 = vunpack.c.l.b16 %v1195
        %v1482 = vunpack.c.h.b16 %v1195
        %v1483 = vunpack.c.l.b16 %v1196
        %v1484 = vunpack.c.h.b16 %v1196
        %v1485 = vunpack.c.l.b16 %v1197
        %v1486 = vunpack.c.h.b16 %v1197
        %v1487 = vunpack.c.l.b16 %v1198
        %v1488 = vunpack.c.h.b16 %v1198
        %v1489 = vunpack.c.l.b16 %v1199
        %v1490 = vunpack.c.h.b16 %v1199
        %v1491 = vunpack.c.l.b16 %v1200
        %v1492 = vunpack.c.h.b16 %v1200
        %v1493 = vunpack.c.l.b16 %v1201
        %v1494 = vunpack.c.h.b16 %v1201
        %v1495 = vunpack.c.l.b16 %v1202
        %v1496 = vunpack.c.h.b16 %v1202
        %v1497 = vunpack.c.l.b16 %v1203
        %v1498 = vunpack.c.h.b16 %v1203
        %v1499 = vunpack.c.l.b16 %v1204
        %v1500 = vunpack.c.h.b16 %v1204
        %v1501 = vunpack.c.l.b16 %v1205
        %v1502 = vunpack.c.h.b16 %v1205
        %v1503 = vunpack.c.l.b16 %v1206
        %v1504 = vunpack.c.h.b16 %v1206
        %v1505 = vunpack.c.l.b16 %v1207
        %v1506 = vunpack.c.h.b16 %v1207
        %v1507 = vunpack.c.l.b16 %v1208
        %v1508 = vunpack.c.h.b16 %v1208
        %v1509 = vunpack.c.l.b16 %v1209
        %v1510 = vunpack.c.h.b16 %v1209
        %v1511 = vunpack.c.l.b16 %v1210
        %v1512 = vunpack.c.h.b16 %v1210
        %v1513 = vunpack.c.l.b16 %v1211
        %v1514 = vunpack.c.h.b16 %v1211
        %v1515 = vunpack.c.l.b16 %v1212
        %v1516 = vunpack.c.h.b16 %v1212
        %v1517 = vunpack.c.l.b16 %v1213
        %v1518 = vunpack.c.h.b16 %v1213
        %v1519 = vunpack.c.l.b16 %v1214
        %v1520 = vunpack.c.h.b16 %v1214
        %v1521 = vunpack.c.l.b16 %v1215
        %v1522 = vunpack.c.h.b16 %v1215
        %v1523 = vunpack.c.l.b16 %v1216
        %v1524 = vunpack.c.h.b16 %v1216
        %v1525 = vunpack.c.l.b16 %v1217
        %v1526 = vunpack.c.h.b16 %v1217
        %v1527 = vunpack.c.l.b16 %v1218
        %v1528 = vunpack.c.h.b16 %v1218
        %v1529 = vunpack.c.l.b16 %v1219
        %v1530 = vunpack.c.h.b16 %v1219
        %v1531 = vunpack.c.l.b16 %v1220
        %v1532 = vunpack.c.h.b16 %v1220
        %v1533 = vunpack.c.l.b16 %v1221
        %v1534 = vunpack.c.h.b16 %v1221
        %v1535 = vunpack.c.l.b16 %v1222
        %v1536 = vunpack.c.h.b16 %v1222
        %v1537 = vunpack.c.l.b16 %v1223
        %v1538 = vunpack.c.h.b16 %v1223
        %v1539 = vunpack.c.l.b16 %v1224
        %v1540 = vunpack.c.h.b16 %v1224
        %v1541 = vunpack.c.l.b16 %v1225
        %v1542 = vunpack.c.h.b16 %v1225
        %v1543 = vunpack.c.l.b16 %v1226
        %v1544 = vunpack.c.h.b16 %v1226
        %v1545 = vunpack.c.l.b16 %v1227
        %v1546 = vunpack.c.h.b16 %v1227
        %v1547 = vunpack.c.l.b16 %v1228
        %v1548 = vunpack.c.h.b16 %v1228
        %v1549 = vunpack.c.l.b16 %v1229
        %v1550 = vunpack.c.h.b16 %v1229
        %v1551 = vunpack.c.l.b16 %v1230
        %v1552 = vunpack.c.h.b16 %v1230
        %v1553 = vunpack.c.l.b16 %v1231
        %v1554 = vunpack.c.h.b16 %v1231
        %v1555 = vunpack.c.l.b16 %v1232
        %v1556 = vunpack.c.h.b16 %v1232
        %v1557 = vunpack.c.l.b16 %v1233
        %v1558 = vunpack.c.h.b16 %v1233
        %v1559 = vunpack.c.l.b16 %v1234
        %v1560 = vunpack.c.h.b16 %v1234
        %v1561 = vunpack.c.l.b16 %v1235
        %v1562 = vunpack.c.h.b16 %v1235
        %v1563 = vunpack.c.l.b16 %v1236
        %v1564 = vunpack.c.h.b16 %v1236
        %v1565 = vunpack.c.l.b16 %v1237
        %v1566 = vunpack.c.h.b16 %v1237
        %v1567 = vunpack.c.l.b16 %v1238
        %v1568 = vunpack.c.h.b16 %v1238
        %v1569 = vunpack.c.l.b16 %v1239
        %v1570 = vunpack.c.h.b16 %v1239
        %v1571 = vunpack.c.l.b16 %v1240
        %v1572 = vunpack.c.h.b16 %v1240
        %v1573 = vunpack.c.l.b16 %v1241
        %v1574 = vunpack.c.h.b16 %v1241
        %v1575 = vunpack.c.l.b16 %v1242
        %v1576 = vunpack.c.h.b16 %v1242
        %v1577 = vunpack.c.l.b16 %v1243
        %v1578 = vunpack.c.h.b16 %v1243
        %v1579 = vunpack.c.l.b16 %v1244
        %v1580 = vunpack.c.h.b16 %v1244
        %v1581 = vunpack.c.l.b16 %v1245
        %v1582 = vunpack.c.h.b16 %v1245
        %v1583 = vunpack.c.l.b16 %v1246
        %v1584 = vunpack.c.h.b16 %v1246
        %v1585 = vunpack.c.l.b16 %v1247
        %v1586 = vunpack.c.h.b16 %v1247
        %v1587 = vunpack.c.l.b16 %v1248
        %v1588 = vunpack.c.h.b16 %v1248
        %v1589 = vunpack.c.l.b16 %v1249
        %v1590 = vunpack.c.h.b16 %v1249
        %v1591 = vunpack.c.l.b16 %v1250
        %v1592 = vunpack.c.h.b16 %v1250
        %v1593 = vunpack.c.l.b16 %v1251
        %v1594 = vunpack.c.h.b16 %v1251
        %v1595 = vunpack.c.l.b16 %v1252
        %v1596 = vunpack.c.h.b16 %v1252
        %v1597 = vunpack.c.l.b16 %v1253
        %v1598 = vunpack.c.h.b16 %v1253
        %v1599 = vunpack.c.l.b16 %v1254
        %v1600 = vunpack.c.h.b16 %v1254
        %v1601 = vunpack.c.l.b16 %v1255
        %v1602 = vunpack.c.h.b16 %v1255
        %v1603 = vunpack.c.l.b16 %v1256
        %v1604 = vunpack.c.h.b16 %v1256
        %v1605 = vunpack.c.l.b16 %v1257
        %v1606 = vunpack.c.h.b16 %v1257
        %v1607 = vpack.c.b16 %v1465, %v1463
        %v1608 = vpack.c.b16 %v1466, %v1464
        %v1609 = vpack.c.b16 %v1469, %v1467
        %v1610 = vpack.c.b16 %v1470, %v1468
        %v1611 = vpack.c.b16 %v1473, %v1471
        %v1612 = vpack.c.b16 %v1474, %v1472
        %v1613 = vpack.c.b16 %v1477, %v1475
        %v1614 = vpack.c.b16 %v1478, %v1476
        %v1615 = vpack.c.b16 %v1481, %v1479
        %v1616 = vpack.c.b16 %v1482, %v1480
        %v1617 = vpack.c.b16 %v1485, %v1483
        %v1618 = vpack.c.b16 %v1486, %v1484
        %v1619 = vpack.c.b16 %v1489, %v1487
        %v1620 = vpack.c.b16 %v1490, %v1488
        %v1621 = vpack.c.b16 %v1493, %v1491
        %v1622 = vpack.c.b16 %v1494, %v1492
        %v1623 = vpack.c.b16 %v1497, %v1495
        %v1624 = vpack.c.b16 %v1498, %v1496
        %v1625 = vpack.c.b16 %v1501, %v1499
        %v1626 = vpack.c.b16 %v1502, %v1500
        %v1627 = vpack.c.b16 %v1505, %v1503
        %v1628 = vpack.c.b16 %v1506, %v1504
        %v1629 = vpack.c.b16 %v1509, %v1507
        %v1630 = vpack.c.b16 %v1510, %v1508
        %v1631 = vpack.c.b16 %v1513, %v1511
        %v1632 = vpack.c.b16 %v1514, %v1512
        %v1633 = vpack.c.b16 %v1517, %v1515
        %v1634 = vpack.c.b16 %v1518, %v1516
        %v1635 = vpack.c.b16 %v1521, %v1519
        %v1636 = vpack.c.b16 %v1522, %v1520
        %v1637 = vpack.c.b16 %v1525, %v1523
        %v1638 = vpack.c.b16 %v1526, %v1524
        %v1639 = vpack.c.b16 %v1529, %v1527
        %v1640 = vpack.c.b16 %v1530, %v1528
        %v1641 = vpack.c.b16 %v1533, %v1531
        %v1642 = vpack.c.b16 %v1534, %v1532
        %v1643 = vpack.c.b16 %v1537, %v1535
        %v1644 = vpack.c.b16 %v1538, %v1536
        %v1645 = vpack.c.b16 %v1541, %v1539
        %v1646 = vpack.c.b16 %v1542, %v1540
        %v1647 = vpack.c.b16 %v1545, %v1543
        %v1648 = vpack.c.b16 %v1546, %v1544
        %v1649 = vpack.c.b16 %v1549, %v1547
        %v1650 = vpack.c.b16 %v1550, %v1548
        %v1651 = vpack.c.b16 %v1553, %v1551
        %v1652 = vpack.c.b16 %v1554, %v1552
        %v1653 = vpack.c.b16 %v1557, %v1555
        %v1654 = vpack.c.b16 %v1558, %v1556
        %v1655 = vpack.c.b16 %v1561, %v1559
        %v1656 = vpack.c.b16 %v1562, %v1560
        %v1657 = vpack.c.b16 %v1565, %v1563
        %v1658 = vpack.c.b16 %v1566, %v1564
        %v1659 = vpack.c.b16 %v1569, %v1567
        %v1660 = vpack.c.b16 %v1570, %v1568
        %v1661 = vpack.c.b16 %v1573, %v1571
        %v1662 = vpack.c.b16 %v1574, %v1572
        %v1663 = vpack.c.b16 %v1577, %v1575
        %v1664 = vpack.c.b16 %v1578, %v1576
        %v1665 = vpack.c.b16 %v1581, %v1579
        %v1666 = vpack.c.b16 %v1582, %v1580
        %v1667 = vpack.c.b16 %v1585, %v1583
        %v1668 = vpack.c.b16 %v1586, %v1584
        %v1669 = vpack.c.b16 %v1589, %v1587
        %v1670 = vpack.c.b16 %v1590, %v1588
        %v1671 = vpack.c.b16 %v1593, %v1591
        %v1672 = vpack.c.b16 %v1594, %v1592
        %v1673 = vpack.c.b16 %v1597, %v1595
        %v1674 = vpack.c.b16 %v1598, %v1596
        %v1675 = vpack.c.b16 %v1601, %v1599
        %v1676 = vpack.c.b16 %v1602, %v1600
        %v1677 = vpack.c.b16 %v1605, %v1603
        %v1678 = vpack.c.b16 %v1606, %v1604
        %v1751 = vsel %vm746, %v1319, 0
        %v1753 = vsel %vm746, %v1340, 0
        %v1755 = vsel %vm746, %v1361, 0
        %v1757 = vsel %vm746, %v1374, 0
        %1759 = vmatpush.bf16.msra.mxu0 %v1621
        %1760 = vmatpush.bf16.msra.mxu0 %v1619
        %1761 = vmatpush.bf16.msra.mxu0 %v1617
        %1762 = vmatpush.bf16.msra.mxu0 %v1615
        %1763 = vmatpush.bf16.msra.mxu0 %v1613
        %1764 = vmatpush.bf16.msra.mxu0 %v1611
        %1765 = vmatpush.bf16.msra.mxu0 %v1609
        %1766 = vmatpush.bf16.msra.mxu0 %v1607
        %1767 = vmatmul.bf16.gmra.mxu0 %v1315
        %v1768 = vpop.f32.mrf.mxu0
        %v1769 = vadd.f32 %v1260, %v1768
        %v1770 = vpop.f32.mrf.mxu0
        %v1771 = vadd.f32 %v1260, %v1770
        %1772 = vmatmul.bf16.gmra.mxu0 %v1336
        %v1773 = vpop.f32.mrf.mxu0
        %v1774 = vadd.f32 %v1260, %v1773
        %v1775 = vpop.f32.mrf.mxu0
        %v1776 = vadd.f32 %v1260, %v1775
        %1777 = vmatmul.bf16.gmra.mxu0 %v1357
        %v1778 = vpop.f32.mrf.mxu0
        %v1779 = vadd.f32 %v1260, %v1778
        %v1780 = vpop.f32.mrf.mxu0
        %v1781 = vadd.f32 %v1260, %v1780
        %1782 = vmatmul.bf16.gmra.mxu0 %v1370
        %v1783 = vpop.f32.mrf.mxu0
        %v1784 = vadd.f32 %v1260, %v1783
        %v1785 = vpop.f32.mrf.mxu0
        %1786 = vdwg.mxu0
        %1787 = vmatpush.bf16.msra.mxu0 %v1637
        %1788 = vmatpush.bf16.msra.mxu0 %v1635
        %1789 = vmatpush.bf16.msra.mxu0 %v1633
        %1790 = vmatpush.bf16.msra.mxu0 %v1631
        %1791 = vmatpush.bf16.msra.mxu0 %v1629
        %1792 = vmatpush.bf16.msra.mxu0 %v1627
        %1793 = vmatpush.bf16.msra.mxu0 %v1625
        %1794 = vmatpush.bf16.msra.mxu0 %v1623
        %1795 = vmatmul.bf16.gmra.mxu0 %v1316
        %v1796 = vpop.f32.mrf.mxu0
        %v1797 = vadd.f32 %v1769, %v1796
        %v1798 = vpop.f32.mrf.mxu0
        %v1799 = vadd.f32 %v1771, %v1798
        %1800 = vmatmul.bf16.gmra.mxu0 %v1337
        %v1801 = vpop.f32.mrf.mxu0
        %v1802 = vadd.f32 %v1774, %v1801
        %v1803 = vpop.f32.mrf.mxu0
        %v1804 = vadd.f32 %v1776, %v1803
        %1805 = vmatmul.bf16.gmra.mxu0 %v1358
        %v1806 = vpop.f32.mrf.mxu0
        %v1807 = vadd.f32 %v1779, %v1806
        %v1808 = vpop.f32.mrf.mxu0
        %v1809 = vadd.f32 %v1781, %v1808
        %1810 = vmatmul.bf16.gmra.mxu0 %v1371
        %v1811 = vpop.f32.mrf.mxu0
        %v1812 = vadd.f32 %v1784, %v1811
        %v1813 = vpop.f32.mrf.mxu0
        %1814 = vdwg.mxu0
        %1815 = vmatpush.bf16.msra.mxu0 %v1653
        %1816 = vmatpush.bf16.msra.mxu0 %v1651
        %1817 = vmatpush.bf16.msra.mxu0 %v1649
        %1818 = vmatpush.bf16.msra.mxu0 %v1647
        %1819 = vmatpush.bf16.msra.mxu0 %v1645
        %1820 = vmatpush.bf16.msra.mxu0 %v1643
        %1821 = vmatpush.bf16.msra.mxu0 %v1641
        %1822 = vmatpush.bf16.msra.mxu0 %v1639
        %1823 = vmatmul.bf16.gmra.mxu0 %v1317
        %v1824 = vpop.f32.mrf.mxu0
        %v1825 = vadd.f32 %v1797, %v1824
        %v1826 = vpop.f32.mrf.mxu0
        %v1827 = vadd.f32 %v1799, %v1826
        %1828 = vmatmul.bf16.gmra.mxu0 %v1338
        %v1829 = vpop.f32.mrf.mxu0
        %v1830 = vadd.f32 %v1802, %v1829
        %v1831 = vpop.f32.mrf.mxu0
        %v1832 = vadd.f32 %v1804, %v1831
        %1833 = vmatmul.bf16.gmra.mxu0 %v1359
        %v1834 = vpop.f32.mrf.mxu0
        %v1835 = vadd.f32 %v1807, %v1834
        %v1836 = vpop.f32.mrf.mxu0
        %v1837 = vadd.f32 %v1809, %v1836
        %1838 = vmatmul.bf16.gmra.mxu0 %v1372
        %v1839 = vpop.f32.mrf.mxu0
        %v1840 = vadd.f32 %v1812, %v1839
        %v1841 = vpop.f32.mrf.mxu0
        %1842 = vdwg.mxu0
        %1843 = vmatpush.bf16.msra.mxu0 %v1669
        %1844 = vmatpush.bf16.msra.mxu0 %v1667
        %1845 = vmatpush.bf16.msra.mxu0 %v1665
        %1846 = vmatpush.bf16.msra.mxu0 %v1663
        %1847 = vmatpush.bf16.msra.mxu0 %v1661
        %1848 = vmatpush.bf16.msra.mxu0 %v1659
        %1849 = vmatpush.bf16.msra.mxu0 %v1657
        %1850 = vmatpush.bf16.msra.mxu0 %v1655
        %1851 = vmatmul.bf16.gmra.mxu0 %v1318
        %v1852 = vpop.f32.mrf.mxu0
        %v1853 = vadd.f32 %v1825, %v1852
        %v1854 = vpop.f32.mrf.mxu0
        %v1855 = vadd.f32 %v1827, %v1854
        %1856 = vmatmul.bf16.gmra.mxu0 %v1339
        %v1857 = vpop.f32.mrf.mxu0
        %v1858 = vadd.f32 %v1830, %v1857
        %v1859 = vpop.f32.mrf.mxu0
        %v1860 = vadd.f32 %v1832, %v1859
        %1861 = vmatmul.bf16.gmra.mxu0 %v1360
        %v1862 = vpop.f32.mrf.mxu0
        %v1863 = vadd.f32 %v1835, %v1862
        %v1864 = vpop.f32.mrf.mxu0
        %v1865 = vadd.f32 %v1837, %v1864
        %1866 = vmatmul.bf16.gmra.mxu0 %v1373
        %v1867 = vpop.f32.mrf.mxu0
        %v1868 = vadd.f32 %v1840, %v1867
        %v1869 = vpop.f32.mrf.mxu0
        %1870 = vdwg.mxu0
        %1871 = vmatpush.bf16.msra.mxu0 0
        %1872 = vmatpush.bf16.msra.mxu0 0
        %1873 = vmatpush.bf16.msra.mxu0 0
        %1874 = vmatpush.bf16.msra.mxu0 0
        %1875 = vmatpush.bf16.msra.mxu0 %v1677
        %1876 = vmatpush.bf16.msra.mxu0 %v1675
        %1877 = vmatpush.bf16.msra.mxu0 %v1673
        %1878 = vmatpush.bf16.msra.mxu0 %v1671
        %1879 = vmatmul.bf16.gmra.mxu0 %v1751
        %v1880 = vpop.f32.mrf.mxu0
        %v1881 = vadd.f32 %v1853, %v1880
        %v1882 = vpop.f32.mrf.mxu0
        %v1883 = vadd.f32 %v1855, %v1882
        %1884 = vmatmul.bf16.gmra.mxu0 %v1753
        %v1885 = vpop.f32.mrf.mxu0
        %v1886 = vadd.f32 %v1858, %v1885
        %v1887 = vpop.f32.mrf.mxu0
        %v1888 = vadd.f32 %v1860, %v1887
        %1889 = vmatmul.bf16.gmra.mxu0 %v1755
        %v1890 = vpop.f32.mrf.mxu0
        %v1891 = vadd.f32 %v1863, %v1890
        %v1892 = vpop.f32.mrf.mxu0
        %v1893 = vadd.f32 %v1865, %v1892
        %1894 = vmatmul.bf16.gmra.mxu0 %v1757
        %v1895 = vpop.f32.mrf.mxu0
        %v1896 = vadd.f32 %v1868, %v1895
        %v1897 = vpop.f32.mrf.mxu0
        %1898 = vdwg.mxu0
        %1899 = vmatpush.bf16.msra.mxu0 %v1622
        %1900 = vmatpush.bf16.msra.mxu0 %v1620
        %1901 = vmatpush.bf16.msra.mxu0 %v1618
        %1902 = vmatpush.bf16.msra.mxu0 %v1616
        %1903 = vmatpush.bf16.msra.mxu0 %v1614
        %1904 = vmatpush.bf16.msra.mxu0 %v1612
        %1905 = vmatpush.bf16.msra.mxu0 %v1610
        %1906 = vmatpush.bf16.msra.mxu0 %v1608
        %1907 = vmatmul.bf16.gmra.mxu0 %v1315
        %v1908 = vpop.f32.mrf.mxu0
        %v1909 = vadd.f32 %v1261, %v1908
        %v1910 = vpop.f32.mrf.mxu0
        %v1911 = vadd.f32 %v1261, %v1910
        %1912 = vmatmul.bf16.gmra.mxu0 %v1336
        %v1913 = vpop.f32.mrf.mxu0
        %v1914 = vadd.f32 %v1261, %v1913
        %v1915 = vpop.f32.mrf.mxu0
        %v1916 = vadd.f32 %v1261, %v1915
        %1917 = vmatmul.bf16.gmra.mxu0 %v1357
        %v1918 = vpop.f32.mrf.mxu0
        %v1919 = vadd.f32 %v1261, %v1918
        %v1920 = vpop.f32.mrf.mxu0
        %v1921 = vadd.f32 %v1261, %v1920
        %1922 = vmatmul.bf16.gmra.mxu0 %v1370
        %v1923 = vpop.f32.mrf.mxu0
        %v1924 = vadd.f32 %v1261, %v1923
        %v1925 = vpop.f32.mrf.mxu0
        %1926 = vdwg.mxu0
        %1927 = vmatpush.bf16.msra.mxu0 %v1638
        %1928 = vmatpush.bf16.msra.mxu0 %v1636
        %1929 = vmatpush.bf16.msra.mxu0 %v1634
        %1930 = vmatpush.bf16.msra.mxu0 %v1632
        %1931 = vmatpush.bf16.msra.mxu0 %v1630
        %1932 = vmatpush.bf16.msra.mxu0 %v1628
        %1933 = vmatpush.bf16.msra.mxu0 %v1626
        %1934 = vmatpush.bf16.msra.mxu0 %v1624
        %1935 = vmatmul.bf16.gmra.mxu0 %v1316
        %v1936 = vpop.f32.mrf.mxu0
        %v1937 = vadd.f32 %v1909, %v1936
        %v1938 = vpop.f32.mrf.mxu0
        %v1939 = vadd.f32 %v1911, %v1938
        %1940 = vmatmul.bf16.gmra.mxu0 %v1337
        %v1941 = vpop.f32.mrf.mxu0
        %v1942 = vadd.f32 %v1914, %v1941
        %v1943 = vpop.f32.mrf.mxu0
        %v1944 = vadd.f32 %v1916, %v1943
        %1945 = vmatmul.bf16.gmra.mxu0 %v1358
        %v1946 = vpop.f32.mrf.mxu0
        %v1947 = vadd.f32 %v1919, %v1946
        %v1948 = vpop.f32.mrf.mxu0
        %v1949 = vadd.f32 %v1921, %v1948
        %1950 = vmatmul.bf16.gmra.mxu0 %v1371
        %v1951 = vpop.f32.mrf.mxu0
        %v1952 = vadd.f32 %v1924, %v1951
        %v1953 = vpop.f32.mrf.mxu0
        %1954 = vdwg.mxu0
        %1955 = vmatpush.bf16.msra.mxu0 %v1654
        %1956 = vmatpush.bf16.msra.mxu0 %v1652
        %1957 = vmatpush.bf16.msra.mxu0 %v1650
        %1958 = vmatpush.bf16.msra.mxu0 %v1648
        %1959 = vmatpush.bf16.msra.mxu0 %v1646
        %1960 = vmatpush.bf16.msra.mxu0 %v1644
        %1961 = vmatpush.bf16.msra.mxu0 %v1642
        %1962 = vmatpush.bf16.msra.mxu0 %v1640
        %1963 = vmatmul.bf16.gmra.mxu0 %v1317
        %v1964 = vpop.f32.mrf.mxu0
        %v1965 = vadd.f32 %v1937, %v1964
        %v1966 = vpop.f32.mrf.mxu0
        %v1967 = vadd.f32 %v1939, %v1966
        %1968 = vmatmul.bf16.gmra.mxu0 %v1338
        %v1969 = vpop.f32.mrf.mxu0
        %v1970 = vadd.f32 %v1942, %v1969
        %v1971 = vpop.f32.mrf.mxu0
        %v1972 = vadd.f32 %v1944, %v1971
        %1973 = vmatmul.bf16.gmra.mxu0 %v1359
        %v1974 = vpop.f32.mrf.mxu0
        %v1975 = vadd.f32 %v1947, %v1974
        %v1976 = vpop.f32.mrf.mxu0
        %v1977 = vadd.f32 %v1949, %v1976
        %1978 = vmatmul.bf16.gmra.mxu0 %v1372
        %v1979 = vpop.f32.mrf.mxu0
        %v1980 = vadd.f32 %v1952, %v1979
        %v1981 = vpop.f32.mrf.mxu0
        %1982 = vdwg.mxu0
        %1983 = vmatpush.bf16.msra.mxu0 %v1670
        %1984 = vmatpush.bf16.msra.mxu0 %v1668
        %1985 = vmatpush.bf16.msra.mxu0 %v1666
        %1986 = vmatpush.bf16.msra.mxu0 %v1664
        %1987 = vmatpush.bf16.msra.mxu0 %v1662
        %1988 = vmatpush.bf16.msra.mxu0 %v1660
        %1989 = vmatpush.bf16.msra.mxu0 %v1658
        %1990 = vmatpush.bf16.msra.mxu0 %v1656
        %1991 = vmatmul.bf16.gmra.mxu0 %v1318
        %v1992 = vpop.f32.mrf.mxu0
        %v1993 = vadd.f32 %v1965, %v1992
        %v1994 = vpop.f32.mrf.mxu0
        %v1995 = vadd.f32 %v1967, %v1994
        %1996 = vmatmul.bf16.gmra.mxu0 %v1339
        %v1997 = vpop.f32.mrf.mxu0
        %v1998 = vadd.f32 %v1970, %v1997
        %v1999 = vpop.f32.mrf.mxu0
        %v2000 = vadd.f32 %v1972, %v1999
        %2001 = vmatmul.bf16.gmra.mxu0 %v1360
        %v2002 = vpop.f32.mrf.mxu0
        %v2003 = vadd.f32 %v1975, %v2002
        %v2004 = vpop.f32.mrf.mxu0
        %v2005 = vadd.f32 %v1977, %v2004
        %2006 = vmatmul.bf16.gmra.mxu0 %v1373
        %v2007 = vpop.f32.mrf.mxu0
        %v2008 = vadd.f32 %v1980, %v2007
        %v2009 = vpop.f32.mrf.mxu0
        %2010 = vdwg.mxu0
        %2011 = vmatpush.bf16.msra.mxu0 0
        %2012 = vmatpush.bf16.msra.mxu0 0
        %2013 = vmatpush.bf16.msra.mxu0 0
        %2014 = vmatpush.bf16.msra.mxu0 0
        %2015 = vmatpush.bf16.msra.mxu0 %v1678
        %2016 = vmatpush.bf16.msra.mxu0 %v1676
        %2017 = vmatpush.bf16.msra.mxu0 %v1674
        %2018 = vmatpush.bf16.msra.mxu0 %v1672
        %2019 = vmatmul.bf16.gmra.mxu0 %v1751
        %v2020 = vpop.f32.mrf.mxu0
        %v2021 = vadd.f32 %v1993, %v2020
        %v2022 = vpop.f32.mrf.mxu0
        %v2023 = vadd.f32 %v1995, %v2022
        %2024 = vmatmul.bf16.gmra.mxu0 %v1753
        %v2025 = vpop.f32.mrf.mxu0
        %v2026 = vadd.f32 %v1998, %v2025
        %v2027 = vpop.f32.mrf.mxu0
        %v2028 = vadd.f32 %v2000, %v2027
        %2029 = vmatmul.bf16.gmra.mxu0 %v1755
        %v2030 = vpop.f32.mrf.mxu0
        %v2031 = vadd.f32 %v2003, %v2030
        %v2032 = vpop.f32.mrf.mxu0
        %v2033 = vadd.f32 %v2005, %v2032
        %2034 = vmatmul.bf16.gmra.mxu0 %v1757
        %v2035 = vpop.f32.mrf.mxu0
        %v2036 = vadd.f32 %v2008, %v2035
        %v2037 = vpop.f32.mrf.mxu0
        %2038 = vdwg.mxu0
        %vm2039 = vcmp.gt.f32.partialorder %v1881, 0.0
        %vm2040 = vcmp.gt.f32.partialorder %v2021, 0.0
        %vm2041 = vcmp.gt.f32.partialorder %v1883, 0.0
        %vm2042 = vcmp.gt.f32.partialorder %v2023, 0.0
        %vm2043 = vcmp.gt.f32.partialorder %v1886, 0.0
        %vm2044 = vcmp.gt.f32.partialorder %v2026, 0.0
        %vm2045 = vcmp.gt.f32.partialorder %v1888, 0.0
        %vm2046 = vcmp.gt.f32.partialorder %v2028, 0.0
        %vm2047 = vcmp.gt.f32.partialorder %v1891, 0.0
        %vm2048 = vcmp.gt.f32.partialorder %v2031, 0.0
        %vm2049 = vcmp.gt.f32.partialorder %v1893, 0.0
        %vm2050 = vcmp.gt.f32.partialorder %v2033, 0.0
        %vm2051 = vcmp.gt.f32.partialorder %v1896, 0.0
        %vm2052 = vcmp.gt.f32.partialorder %v2036, 0.0
        %v2053 = vmul.f32 %v1881, 0.1
        %v2054 = vmul.f32 %v2021, 0.1
        %v2055 = vmul.f32 %v1883, 0.1
        %v2056 = vmul.f32 %v2023, 0.1
        %v2057 = vmul.f32 %v1886, 0.1
        %v2058 = vmul.f32 %v2026, 0.1
        %v2059 = vmul.f32 %v1888, 0.1
        %v2060 = vmul.f32 %v2028, 0.1
        %v2061 = vmul.f32 %v1891, 0.1
        %v2062 = vmul.f32 %v2031, 0.1
        %v2063 = vmul.f32 %v1893, 0.1
        %v2064 = vmul.f32 %v2033, 0.1
        %v2065 = vmul.f32 %v1896, 0.1
        %v2066 = vmul.f32 %v2036, 0.1
        %v2067 = vsel %vm2039, %v1881, %v2053
        %v2068 = vsel %vm2040, %v2021, %v2054
        %v2069 = vsel %vm2041, %v1883, %v2055
        %v2070 = vsel %vm2042, %v2023, %v2056
        %v2071 = vsel %vm2043, %v1886, %v2057
        %v2072 = vsel %vm2044, %v2026, %v2058
        %v2073 = vsel %vm2045, %v1888, %v2059
        %v2074 = vsel %vm2046, %v2028, %v2060
        %v2075 = vsel %vm2047, %v1891, %v2061
        %v2076 = vsel %vm2048, %v2031, %v2062
        %v2077 = vsel %vm2049, %v1893, %v2063
        %v2078 = vsel %vm2050, %v2033, %v2064
        %v2079 = vsel %vm2051, %v1896, %v2065
        %v2080 = vsel %vm2052, %v2036, %v2066
        %v2095 = vrot.slane %v2068, 7
        %v2096 = vrot.slane %v2070, 7
        %v2097 = vrot.slane %v2072, 7
        %v2098 = vrot.slane %v2074, 7
        %v2099 = vrot.slane %v2076, 7
        %v2100 = vrot.slane %v2078, 7
        %v2101 = vrot.slane %v2080, 7
        %v2102 = vsel %vm899, %v2067, %v2095
        %v2103 = vsel %vm912, %v2067, %v2095
        %v2104 = vrot.slane %v2103, 1
        %v2105 = vsel %vm922, %v2067, %v2095
        %v2106 = vrot.slane %v2105, 2
        %v2107 = vsel %vm905, %v2067, %v2095
        %v2108 = vrot.slane %v2107, 3
        %v2109 = vsel %vm916, %v2067, %v2095
        %v2110 = vrot.slane %v2109, 4
        %v2111 = vsel %vm926, %v2067, %v2095
        %v2112 = vrot.slane %v2111, 5
        %v2113 = vsel %vm935, %v2067, %v2095
        %v2114 = vrot.slane %v2113, 6
        %vm2115 = vcmask 1046528
        %v2116 = vsel %vm2115, %v2095, %v2067
        %v2117 = vrot.slane %v2116, 7
        %v2118 = vsel %vm899, %v2069, %v2096
        %v2119 = vsel %vm912, %v2069, %v2096
        %v2120 = vrot.slane %v2119, 1
        %v2121 = vsel %vm922, %v2069, %v2096
        %v2122 = vrot.slane %v2121, 2
        %v2123 = vsel %vm905, %v2069, %v2096
        %v2124 = vrot.slane %v2123, 3
        %v2125 = vsel %vm916, %v2069, %v2096
        %v2126 = vrot.slane %v2125, 4
        %v2127 = vsel %vm926, %v2069, %v2096
        %v2128 = vrot.slane %v2127, 5
        %v2129 = vsel %vm935, %v2069, %v2096
        %v2130 = vrot.slane %v2129, 6
        %v2131 = vsel %vm2115, %v2096, %v2069
        %v2132 = vrot.slane %v2131, 7
        %v2133 = vsel %vm899, %v2071, %v2097
        %v2134 = vsel %vm912, %v2071, %v2097
        %v2135 = vrot.slane %v2134, 1
        %v2136 = vsel %vm922, %v2071, %v2097
        %v2137 = vrot.slane %v2136, 2
        %v2138 = vsel %vm905, %v2071, %v2097
        %v2139 = vrot.slane %v2138, 3
        %v2140 = vsel %vm916, %v2071, %v2097
        %v2141 = vrot.slane %v2140, 4
        %v2142 = vsel %vm926, %v2071, %v2097
        %v2143 = vrot.slane %v2142, 5
        %v2144 = vsel %vm935, %v2071, %v2097
        %v2145 = vrot.slane %v2144, 6
        %v2146 = vsel %vm2115, %v2097, %v2071
        %v2147 = vrot.slane %v2146, 7
        %v2148 = vsel %vm899, %v2073, %v2098
        %v2149 = vsel %vm912, %v2073, %v2098
        %v2150 = vrot.slane %v2149, 1
        %v2151 = vsel %vm922, %v2073, %v2098
        %v2152 = vrot.slane %v2151, 2
        %v2153 = vsel %vm905, %v2073, %v2098
        %v2154 = vrot.slane %v2153, 3
        %v2155 = vsel %vm916, %v2073, %v2098
        %v2156 = vrot.slane %v2155, 4
        %v2157 = vsel %vm926, %v2073, %v2098
        %v2158 = vrot.slane %v2157, 5
        %v2159 = vsel %vm935, %v2073, %v2098
        %v2160 = vrot.slane %v2159, 6
        %v2161 = vsel %vm2115, %v2098, %v2073
        %v2162 = vrot.slane %v2161, 7
        %v2163 = vsel %vm899, %v2075, %v2099
        %v2164 = vsel %vm912, %v2075, %v2099
        %v2165 = vrot.slane %v2164, 1
        %v2166 = vsel %vm922, %v2075, %v2099
        %v2167 = vrot.slane %v2166, 2
        %v2168 = vsel %vm905, %v2075, %v2099
        %v2169 = vrot.slane %v2168, 3
        %v2170 = vsel %vm916, %v2075, %v2099
        %v2171 = vrot.slane %v2170, 4
        %v2172 = vsel %vm926, %v2075, %v2099
        %v2173 = vrot.slane %v2172, 5
        %v2174 = vsel %vm935, %v2075, %v2099
        %v2175 = vrot.slane %v2174, 6
        %v2176 = vsel %vm2115, %v2099, %v2075
        %v2177 = vrot.slane %v2176, 7
        %v2178 = vsel %vm899, %v2077, %v2100
        %v2179 = vsel %vm912, %v2077, %v2100
        %v2180 = vrot.slane %v2179, 1
        %v2181 = vsel %vm922, %v2077, %v2100
        %v2182 = vrot.slane %v2181, 2
        %v2183 = vsel %vm905, %v2077, %v2100
        %v2184 = vrot.slane %v2183, 3
        %v2185 = vsel %vm916, %v2077, %v2100
        %v2186 = vrot.slane %v2185, 4
        %v2187 = vsel %vm926, %v2077, %v2100
        %v2188 = vrot.slane %v2187, 5
        %v2189 = vsel %vm935, %v2077, %v2100
        %v2190 = vrot.slane %v2189, 6
        %v2191 = vsel %vm2115, %v2100, %v2077
        %v2192 = vrot.slane %v2191, 7
        %v2193 = vsel %vm899, %v2079, %v2101
        %v2194 = vsel %vm912, %v2079, %v2101
        %v2195 = vrot.slane %v2194, 1
        %v2196 = vsel %vm922, %v2079, %v2101
        %v2197 = vrot.slane %v2196, 2
        %v2198 = vsel %vm905, %v2079, %v2101
        %v2199 = vrot.slane %v2198, 3
        %v2200 = vsel %vm916, %v2079, %v2101
        %v2201 = vrot.slane %v2200, 4
        %v2202 = vsel %vm926, %v2079, %v2101
        %v2203 = vrot.slane %v2202, 5
        %v2204 = vsel %vm935, %v2079, %v2101
        %v2205 = vrot.slane %v2204, 6
        %v2206 = vsel %vm2115, %v2101, %v2079
        %v2207 = vrot.slane %v2206, 7
        %2208 = vst [vmem:[#allocation1] ss:$9 sm:$0xff] %v2102
        %s2209 = scalar_lea.vmem [#allocation1], 1
        %2210 = vst [vmem:[%s2209] ss:$9 sm:$0xff] %v2104
        %s2211 = scalar_lea.vmem [#allocation1], 2
        %2212 = vst [vmem:[%s2211] ss:$9 sm:$0xff] %v2106
        %s2213 = scalar_lea.vmem [#allocation1], 3
        %2214 = vst [vmem:[%s2213] ss:$9 sm:$0xff] %v2108
        %s2215 = scalar_lea.vmem [#allocation1], 4
        %2216 = vst [vmem:[%s2215] ss:$9 sm:$0xff] %v2110
        %s2217 = scalar_lea.vmem [#allocation1], 5
        %2218 = vst [vmem:[%s2217] ss:$9 sm:$0xff] %v2112
        %s2219 = scalar_lea.vmem [#allocation1], 6
        %2220 = vst [vmem:[%s2219] ss:$9 sm:$0xff] %v2114
        %v2221 = vld [vmem:[#allocation1] sm:$0xff]
        %2222 = vst [vmem:[#allocation1] ss:$9 sm:$0xff] %v2117
        %2223 = vst [vmem:[%s2209] ss:$9 sm:$0xff] %v2118
        %2224 = vst [vmem:[%s2211] ss:$9 sm:$0xff] %v2120
        %2225 = vst [vmem:[%s2213] ss:$9 sm:$0xff] %v2122
        %2226 = vst [vmem:[%s2215] ss:$9 sm:$0xff] %v2124
        %2227 = vst [vmem:[%s2217] ss:$9 sm:$0xff] %v2126
        %2228 = vst [vmem:[%s2219] ss:$9 sm:$0xff] %v2128
        %v2229 = vld [vmem:[#allocation1] sm:$0xff]
        %2230 = vst [vmem:[#allocation1] ss:$9 sm:$0xff] %v2130
        %2231 = vst [vmem:[%s2209] ss:$9 sm:$0xff] %v2132
        %2232 = vst [vmem:[%s2211] ss:$9 sm:$0xff] %v2133
        %2233 = vst [vmem:[%s2213] ss:$9 sm:$0xff] %v2135
        %2234 = vst [vmem:[%s2215] ss:$9 sm:$0xff] %v2137
        %2235 = vst [vmem:[%s2217] ss:$9 sm:$0xff] %v2139
        %2236 = vst [vmem:[%s2219] ss:$9 sm:$0xff] %v2141
        %v2237 = vld [vmem:[#allocation1] sm:$0xff]
        %2238 = vst [vmem:[#allocation1] ss:$9 sm:$0xff] %v2143
        %2239 = vst [vmem:[%s2209] ss:$9 sm:$0xff] %v2145
        %2240 = vst [vmem:[%s2211] ss:$9 sm:$0xff] %v2147
        %2241 = vst [vmem:[%s2213] ss:$9 sm:$0xff] %v2148
        %2242 = vst [vmem:[%s2215] ss:$9 sm:$0xff] %v2150
        %2243 = vst [vmem:[%s2217] ss:$9 sm:$0xff] %v2152
        %2244 = vst [vmem:[%s2219] ss:$9 sm:$0xff] %v2154
        %v2245 = vld [vmem:[#allocation1] sm:$0xff]
        %2246 = vst [vmem:[#allocation1] ss:$9 sm:$0xff] %v2156
        %2247 = vst [vmem:[%s2209] ss:$9 sm:$0xff] %v2158
        %2248 = vst [vmem:[%s2211] ss:$9 sm:$0xff] %v2160
        %2249 = vst [vmem:[%s2213] ss:$9 sm:$0xff] %v2162
        %2250 = vst [vmem:[%s2215] ss:$9 sm:$0xff] %v2163
        %2251 = vst [vmem:[%s2217] ss:$9 sm:$0xff] %v2165
        %2252 = vst [vmem:[%s2219] ss:$9 sm:$0xff] %v2167
        %v2253 = vld [vmem:[#allocation1] sm:$0xff]
        %2254 = vst [vmem:[#allocation1] ss:$9 sm:$0xff] %v2169
        %2255 = vst [vmem:[%s2209] ss:$9 sm:$0xff] %v2171
        %2256 = vst [vmem:[%s2211] ss:$9 sm:$0xff] %v2173
        %2257 = vst [vmem:[%s2213] ss:$9 sm:$0xff] %v2175
        %2258 = vst [vmem:[%s2215] ss:$9 sm:$0xff] %v2177
        %2259 = vst [vmem:[%s2217] ss:$9 sm:$0xff] %v2178
        %2260 = vst [vmem:[%s2219] ss:$9 sm:$0xff] %v2180
        %v2261 = vld [vmem:[#allocation1] sm:$0xff]
        %2262 = vst [vmem:[#allocation1] ss:$9 sm:$0xff] %v2182
        %2263 = vst [vmem:[%s2209] ss:$9 sm:$0xff] %v2184
        %2264 = vst [vmem:[%s2211] ss:$9 sm:$0xff] %v2186
        %2265 = vst [vmem:[%s2213] ss:$9 sm:$0xff] %v2188
        %2266 = vst [vmem:[%s2215] ss:$9 sm:$0xff] %v2190
        %2267 = vst [vmem:[%s2217] ss:$9 sm:$0xff] %v2192
        %2268 = vst [vmem:[%s2219] ss:$9 sm:$0xff] %v2193
        %v2269 = vld [vmem:[#allocation1] sm:$0xff]
        %2270 = vst [vmem:[#allocation1] ss:$9 sm:$0xff] %v2195
        %2271 = vst [vmem:[%s2209] ss:$9 sm:$0xff] %v2197
        %2272 = vst [vmem:[%s2211] ss:$9 sm:$0xff] %v2199
        %2273 = vst [vmem:[%s2213] ss:$9 sm:$0xff] %v2201
        %2274 = vst [vmem:[%s2215] ss:$9 sm:$0xff] %v2203
        %2275 = vst [vmem:[%s2217] ss:$9 sm:$0xff] %v2205
        %2276 = vst [vmem:[%s2219] ss:$9 sm:$0xff] %v2207
        %v2277 = vld [vmem:[#allocation1] sm:$0xff]
        %2286 = vst [vmem:[%s211] sm:$0x7f] %v2221
        %2287 = vst [vmem:[%s211 + $0x10] sm:$0x7f] %v2229
        %2288 = vst [vmem:[%s211 + $0x20] sm:$0x7f] %v2237
        %2289 = vst [vmem:[%s211 + $0x30] sm:$0x7f] %v2245
        %2290 = vst [vmem:[%s211 + $0x40] sm:$0x7f] %v2253
        %2291 = vst [vmem:[%s211 + $0x50] sm:$0x7f] %v2261
        %2292 = vst [vmem:[%s211 + $0x60] sm:$0x7f] %v2269
        %2293 = vst [vmem:[%s211 + $0x70] sm:$0x7f] %v2277
        %v2294 = vrot.slane %v2102, 1
        %v2295 = vrot.slane %v2104, 1
        %v2296 = vrot.slane %v2106, 1
        %v2297 = vrot.slane %v2108, 1
        %v2298 = vrot.slane %v2110, 1
        %v2299 = vrot.slane %v2112, 1
        %v2300 = vrot.slane %v2114, 1
        %v2301 = vrot.slane %v2117, 1
        %v2302 = vrot.slane %v2118, 1
        %v2303 = vrot.slane %v2120, 1
        %v2304 = vrot.slane %v2122, 1
        %v2305 = vrot.slane %v2124, 1
        %v2306 = vrot.slane %v2126, 1
        %v2307 = vrot.slane %v2128, 1
        %v2308 = vrot.slane %v2130, 1
        %v2309 = vrot.slane %v2132, 1
        %v2310 = vrot.slane %v2133, 1
        %v2311 = vrot.slane %v2135, 1
        %v2312 = vrot.slane %v2137, 1
        %v2313 = vrot.slane %v2139, 1
        %v2314 = vrot.slane %v2141, 1
        %v2315 = vrot.slane %v2143, 1
        %v2316 = vrot.slane %v2145, 1
        %v2317 = vrot.slane %v2147, 1
        %v2318 = vrot.slane %v2148, 1
        %v2319 = vrot.slane %v2150, 1
        %v2320 = vrot.slane %v2152, 1
        %v2321 = vrot.slane %v2154, 1
        %v2322 = vrot.slane %v2156, 1
        %v2323 = vrot.slane %v2158, 1
        %v2324 = vrot.slane %v2160, 1
        %v2325 = vrot.slane %v2162, 1
        %v2326 = vrot.slane %v2163, 1
        %v2327 = vrot.slane %v2165, 1
        %v2328 = vrot.slane %v2167, 1
        %v2329 = vrot.slane %v2169, 1
        %v2330 = vrot.slane %v2171, 1
        %v2331 = vrot.slane %v2173, 1
        %v2332 = vrot.slane %v2175, 1
        %v2333 = vrot.slane %v2177, 1
        %v2334 = vrot.slane %v2178, 1
        %v2335 = vrot.slane %v2180, 1
        %v2336 = vrot.slane %v2182, 1
        %v2337 = vrot.slane %v2184, 1
        %v2338 = vrot.slane %v2186, 1
        %v2339 = vrot.slane %v2188, 1
        %v2340 = vrot.slane %v2190, 1
        %v2341 = vrot.slane %v2192, 1
        %v2342 = vrot.slane %v2193, 1
        %v2343 = vrot.slane %v2195, 1
        %v2344 = vrot.slane %v2197, 1
        %v2345 = vrot.slane %v2199, 1
        %v2346 = vrot.slane %v2201, 1
        %v2347 = vrot.slane %v2203, 1
        %v2348 = vrot.slane %v2205, 1
        %v2349 = vrot.slane %v2207, 1
        %2350 = vst [vmem:[#allocation1] ss:$9 sm:$0xff] %v2294
        %s2351 = scalar_lea.vmem [#allocation1], 1
        %2352 = vst [vmem:[%s2351] ss:$9 sm:$0xff] %v2295
        %s2353 = scalar_lea.vmem [#allocation1], 2
        %2354 = vst [vmem:[%s2353] ss:$9 sm:$0xff] %v2296
        %s2355 = scalar_lea.vmem [#allocation1], 3
        %2356 = vst [vmem:[%s2355] ss:$9 sm:$0xff] %v2297
        %s2357 = scalar_lea.vmem [#allocation1], 4
        %2358 = vst [vmem:[%s2357] ss:$9 sm:$0xff] %v2298
        %s2359 = scalar_lea.vmem [#allocation1], 5
        %2360 = vst [vmem:[%s2359] ss:$9 sm:$0xff] %v2299
        %s2361 = scalar_lea.vmem [#allocation1], 6
        %2362 = vst [vmem:[%s2361] ss:$9 sm:$0xff] %v2300
        %v2363 = vld [vmem:[#allocation1] sm:$0xff]
        %2364 = vst [vmem:[#allocation1] ss:$9 sm:$0xff] %v2301
        %2365 = vst [vmem:[%s2351] ss:$9 sm:$0xff] %v2302
        %2366 = vst [vmem:[%s2353] ss:$9 sm:$0xff] %v2303
        %2367 = vst [vmem:[%s2355] ss:$9 sm:$0xff] %v2304
        %2368 = vst [vmem:[%s2357] ss:$9 sm:$0xff] %v2305
        %2369 = vst [vmem:[%s2359] ss:$9 sm:$0xff] %v2306
        %2370 = vst [vmem:[%s2361] ss:$9 sm:$0xff] %v2307
        %v2371 = vld [vmem:[#allocation1] sm:$0xff]
        %2372 = vst [vmem:[#allocation1] ss:$9 sm:$0xff] %v2308
        %2373 = vst [vmem:[%s2351] ss:$9 sm:$0xff] %v2309
        %2374 = vst [vmem:[%s2353] ss:$9 sm:$0xff] %v2310
        %2375 = vst [vmem:[%s2355] ss:$9 sm:$0xff] %v2311
        %2376 = vst [vmem:[%s2357] ss:$9 sm:$0xff] %v2312
        %2377 = vst [vmem:[%s2359] ss:$9 sm:$0xff] %v2313
        %2378 = vst [vmem:[%s2361] ss:$9 sm:$0xff] %v2314
        %v2379 = vld [vmem:[#allocation1] sm:$0xff]
        %2380 = vst [vmem:[#allocation1] ss:$9 sm:$0xff] %v2315
        %2381 = vst [vmem:[%s2351] ss:$9 sm:$0xff] %v2316
        %2382 = vst [vmem:[%s2353] ss:$9 sm:$0xff] %v2317
        %2383 = vst [vmem:[%s2355] ss:$9 sm:$0xff] %v2318
        %2384 = vst [vmem:[%s2357] ss:$9 sm:$0xff] %v2319
        %2385 = vst [vmem:[%s2359] ss:$9 sm:$0xff] %v2320
        %2386 = vst [vmem:[%s2361] ss:$9 sm:$0xff] %v2321
        %v2387 = vld [vmem:[#allocation1] sm:$0xff]
        %2388 = vst [vmem:[#allocation1] ss:$9 sm:$0xff] %v2322
        %2389 = vst [vmem:[%s2351] ss:$9 sm:$0xff] %v2323
        %2390 = vst [vmem:[%s2353] ss:$9 sm:$0xff] %v2324
        %2391 = vst [vmem:[%s2355] ss:$9 sm:$0xff] %v2325
        %2392 = vst [vmem:[%s2357] ss:$9 sm:$0xff] %v2326
        %2393 = vst [vmem:[%s2359] ss:$9 sm:$0xff] %v2327
        %2394 = vst [vmem:[%s2361] ss:$9 sm:$0xff] %v2328
        %v2395 = vld [vmem:[#allocation1] sm:$0xff]
        %2396 = vst [vmem:[#allocation1] ss:$9 sm:$0xff] %v2329
        %2397 = vst [vmem:[%s2351] ss:$9 sm:$0xff] %v2330
        %2398 = vst [vmem:[%s2353] ss:$9 sm:$0xff] %v2331
        %2399 = vst [vmem:[%s2355] ss:$9 sm:$0xff] %v2332
        %2400 = vst [vmem:[%s2357] ss:$9 sm:$0xff] %v2333
        %2401 = vst [vmem:[%s2359] ss:$9 sm:$0xff] %v2334
        %2402 = vst [vmem:[%s2361] ss:$9 sm:$0xff] %v2335
        %v2403 = vld [vmem:[#allocation1] sm:$0xff]
        %2404 = vst [vmem:[#allocation1] ss:$9 sm:$0xff] %v2336
        %2405 = vst [vmem:[%s2351] ss:$9 sm:$0xff] %v2337
        %2406 = vst [vmem:[%s2353] ss:$9 sm:$0xff] %v2338
        %2407 = vst [vmem:[%s2355] ss:$9 sm:$0xff] %v2339
        %2408 = vst [vmem:[%s2357] ss:$9 sm:$0xff] %v2340
        %2409 = vst [vmem:[%s2359] ss:$9 sm:$0xff] %v2341
        %2410 = vst [vmem:[%s2361] ss:$9 sm:$0xff] %v2342
        %v2411 = vld [vmem:[#allocation1] sm:$0xff]
        %2412 = vst [vmem:[#allocation1] ss:$9 sm:$0xff] %v2343
        %2413 = vst [vmem:[%s2351] ss:$9 sm:$0xff] %v2344
        %2414 = vst [vmem:[%s2353] ss:$9 sm:$0xff] %v2345
        %2415 = vst [vmem:[%s2355] ss:$9 sm:$0xff] %v2346
        %2416 = vst [vmem:[%s2357] ss:$9 sm:$0xff] %v2347
        %2417 = vst [vmem:[%s2359] ss:$9 sm:$0xff] %v2348
        %2418 = vst [vmem:[%s2361] ss:$9 sm:$0xff] %v2349
        %v2419 = vld [vmem:[#allocation1] sm:$0xff]
        %s2428 = scalar_lea.vmem %s211, 8
        %2429 = vst [vmem:[%s2428] sm:$0x7f] %v2363
        %2430 = vst [vmem:[%s2428 + $0x10] sm:$0x7f] %v2371
        %2431 = vst [vmem:[%s2428 + $0x20] sm:$0x7f] %v2379
        %2432 = vst [vmem:[%s2428 + $0x30] sm:$0x7f] %v2387
        %2433 = vst [vmem:[%s2428 + $0x40] sm:$0x7f] %v2395
        %2434 = vst [vmem:[%s2428 + $0x50] sm:$0x7f] %v2403
        %2435 = vst [vmem:[%s2428 + $0x60] sm:$0x7f] %v2411
        %2436 = vst [vmem:[%s2428 + $0x70] sm:$0x7f] %v2419
        %s2437 = smul.u32 8, %s20
        %p2438 = scmp.lt.s32.totalorder %s19, 1
        %s2439 = scalar_select %p2438, %s19, 1
        %p2440 = scmp.lt.s32.totalorder %s2437, 7
        %s2441 = scalar_select %p2440, %s2437, 7
        %s2442 = smul.addr %s2441, 2
        %s2443 = smul.addr %s2439, 16
        %s2444 = sadd.s32 %s2442, %s2443
        %s2445 = smul.addr %s2444, 8
        %s2446 = scalar_lea.vmem %s3, %s2445
        // Predicated region
        $region37: #{tpu_custom_call.1} parent=31 // pred_check
          %p2447 = pneg %p115
        $region38: #{tpu_custom_call.1} parent=31 // pred_check_branch
          %2449 = sbr.rel (%p2447) target = $region40
        $region39: #{tpu_custom_call.1} parent=31 // pred_region
          %s2450 = smul.u32 8, %s20
        $region40: #{tpu_custom_call.1} parent=31 // pred_fallthru
          _
      $region32: #{tpu_custom_call.1} parent=5 // pred_fallthru
        _
      %p2451 = scmp.le.s32.totalorder 2, %s10
      // Predicated region
      $region41: #{tpu_custom_call.1} parent=5 // pred_check
        %p2452 = pneg %p2451
      $region42: #{tpu_custom_call.1} parent=5 // pred_check_branch
        %2454 = sbr.rel (%p2452) target = $region44
      $region43: #{tpu_custom_call.1} parent=5 // pred_region
        %s2455 = ssub.s32 %s10, 2
        // Predicated region
        $region45: #{tpu_custom_call.1} parent=43 // pred_check
          %p2456 = pneg %p121
        $region46: #{tpu_custom_call.1} parent=43 // pred_check_branch
          %2458 = sbr.rel (%p2456) target = $region48
        $region47: #{tpu_custom_call.1} parent=43 // pred_region
          %s2459 = smul.u32 8, %s22
          %p2460 = scmp.lt.s32.totalorder %s21, 1
          %s2461 = scalar_select %p2460, %s21, 1
          %p2462 = scmp.lt.s32.totalorder %s2459, 7
          %s2463 = scalar_select %p2462, %s2459, 7
          %s2464 = smul.addr %s2463, 2
          %s2465 = smul.addr %s2461, 16
          %s2466 = sadd.s32 %s2464, %s2465
          %s2467 = smul.addr %s2466, 8
          %s2468 = scalar_lea.vmem %s3, %s2467
        $region48: #{tpu_custom_call.1} parent=43 // pred_fallthru
          _
      $region44: #{tpu_custom_call.1} parent=5 // pred_fallthru
        _
    $region6: #{tpu_custom_call.1} parent=1 // loop_footer
      %s14 = sadd.s32 1, %s10
    $region7: #{tpu_custom_call.1} parent=1 // loop_footer_branch
      %9 = sbr.rel target = $region3
    $region8: #{tpu_custom_call.1} parent=1 // loop_exit
      _
    %2469 = vsyncpa [#allocation3], 1
    %s2470 = scalar_lea.sflag [#allocation3], 1
    %2471 = vsyncpa %s2470, 1

</llo_original>
